<compile_context>
chip_gen: v7x
topology: tpu7x:2x2x1
jax: 0.10.0
libtpu: 0.0.40
codegen_flags: <defaults>
</compile_context>

<pallas_src>
import jax
import jax.numpy as jnp
import numpy as np
from jax import lax
from jax.experimental import pallas as pl
from jax.experimental.pallas import tpu as pltpu

NEG_SLOPE = 0.01   # nn.LeakyReLU() default
BN_EPS = 1e-5      # nn.BatchNorm2d default


def _lrelu(v):
    return jnp.where(v > 0, v, NEG_SLOPE * v)


def feature_extractor_kernel(
    x_ref,        # (Bt, H, W, C) input tile
    wcat_ref,     # (C, 3C)  BN-folded pointwise weights [branch1 | branch2 | branch3]
    bcat_ref,     # (1, 3C)  BN-folded pointwise biases
    dw3_ref,      # (9, C)   depthwise 3x3 taps
    b3_ref,       # (1, C)   depthwise 3x3 bias
    dw5_ref,      # (25, C)  depthwise 5x5 taps
    b5_ref,       # (1, C)   depthwise 5x5 bias
    scal_ref,     # SMEM (4,): sigma0, sigma1, sigma2, gamma
    o_ref,        # (Bt, H, W, C) output tile
    dwacc_ref,    # VMEM scratch (Bt, H, W, C) f32 — depthwise accumulator
):
    Bt, H, W, C = x_ref.shape
    S = H * W
    mm_dtype = wcat_ref.dtype                      # f32 (exact) or bf16 (MXU fast path)
    use_bf16 = mm_dtype == jnp.bfloat16

    x = x_ref[...].astype(jnp.float32)
    xm = x.reshape(Bt * S, C).astype(mm_dtype)

    # ---- fused BN + 1x1 convs for the three branches ----
    if C % 128 == 0:
        # Lane-aligned slices of one fused (Bt*S, C) x (C, 3C) MXU matmul.
        t = jnp.dot(xm, wcat_ref[...], preferred_element_type=jnp.float32) + bcat_ref[...]
        s1 = _lrelu(t[:, :C])
        t2 = t[:, C:2 * C]
        t3 = t[:, 2 * C:]
    else:
        # C under-fills a lane tile: slicing the big activation would relayout full
        # tiles, so slice the tiny weight instead and run three separate matmuls.
        w = wcat_ref[...]
        b = bcat_ref[...]
        s1 = _lrelu(jnp.dot(xm, w[:, :C], preferred_element_type=jnp.float32) + b[:, :C])
        t2 = jnp.dot(xm, w[:, C:2 * C], preferred_element_type=jnp.float32) + b[:, C:2 * C]
        t3 = jnp.dot(xm, w[:, 2 * C:], preferred_element_type=jnp.float32) + b[:, 2 * C:]
    s1 = s1.reshape(Bt, S, C)
    t2 = t2.reshape(Bt, H, W, C)
    t3 = t3.reshape(Bt, H, W, C)

    # Tiny (1,1,W,1) sublane iota for the roll edge masks (broadcasts over Bt,H,C).
    coli = lax.broadcasted_iota(jnp.int32, (1, 1, W, 1), 2)

    def shifted_cols(t4, k):
        """k W-shifted (zero padded) copies of t4, reused by every dy row-sum."""
        r = k // 2
        cols = []
        for dx in range(k):
            ox = dx - r
            if ox == 0:
                cols.append(t4)
            elif abs(ox) >= W:
                cols.append(jnp.zeros_like(t4))
            elif W % 8 == 0:
                # sublane roll (XLU slot) + tiny-iota edge mask
                rolled = pltpu.roll(t4, (-ox) % W, 2)       # result[w] = t4[(w+ox) % W]
                mask = (coli < (W - ox)) if ox > 0 else (coli >= -ox)
                cols.append(jnp.where(mask, rolled, 0.0))
            else:
                # W not sublane-aligned: safe slice+concat fallback.
                if ox > 0:
                    cols.append(jnp.concatenate(
                        [t4[:, :, ox:, :], jnp.zeros((Bt, H, ox, C), jnp.float32)], axis=2))
                else:
                    cols.append(jnp.concatenate(
                        [jnp.zeros((Bt, H, -ox, C), jnp.float32), t4[:, :, :ox, :]], axis=2))
        return cols

    def dwconv(t4, dw_ref, bias_ref, k):
        """Depthwise kxk conv (stride 1, zero pad k//2) + bias.

        Per-dy row partial sums are built from the W-shifted copies first; the single
        H shift per dy is a static leading-dim slice accumulate into dwacc_ref, so no
        zeros/concatenate full-tile temporaries are materialized.
        """
        r = k // 2
        dw = dw_ref[...]                              # (k*k, C), loaded once
        bias = bias_ref[...].reshape(1, 1, 1, C)      # loaded once
        cols = shifted_cols(t4, k)

        def row_sum(dy):
            row = None
            for dx in range(k):
                term = cols[dx] * dw[dy * k + dx].reshape(1, 1, 1, C)
                row = term if row is None else row + term
            return row

        # Center row (oy == 0) covers every output row -> doubles as the init.
        dwacc_ref[...] = row_sum(r) + bias
        # dy stays a static loop: the H-offset slice sizes must be static, and each
        # dy's partial is folded into VMEM scratch immediately (bounded live ranges).
        for dy in range(k):
            oy = dy - r
            if oy == 0 or abs(oy) >= H:
                continue
            row = row_sum(dy)
            if oy > 0:
                dwacc_ref[:, :H - oy, :, :] += row[:, oy:, :, :]
            else:
                dwacc_ref[:, -oy:, :, :] += row[:, :oy, :, :]
        return _lrelu(dwacc_ref[...])

    s2 = dwconv(t2, dw3_ref, b3_ref, 3).reshape(Bt, S, C)
    s3 = dwconv(t3, dw5_ref, b5_ref, 5).reshape(Bt, S, C)

    sigma0 = scal_ref[0]
    sigma1 = scal_ref[1]
    sigma2 = scal_ref[2]
    gamma = scal_ref[3]
    y = sigma0 * s1 + sigma1 * s2 + sigma2 * s3                      # (Bt, S, C) f32

    # ---- CAM channel attention (per image in the batch tile) ----
    ymm = y.astype(mm_dtype)
    energy = jnp.einsum('bsc,bsd->bcd', ymm, ymm,
                        preferred_element_type=jnp.float32)          # (Bt, C, C)
    # softmax(rowmax(E) - E) == exp(rowmin(E) - E) / sum(...): single row reduction,
    # exactly equivalent to the reference (do not "fix" back to a max+max form).
    z = jnp.min(energy, axis=-1, keepdims=True) - energy
    e = jnp.exp(z)
    attn = e * pl.reciprocal(jnp.sum(e, axis=-1, keepdims=True), approx=use_bf16)
    out = jnp.einsum('bsd,bcd->bsc', ymm, attn.astype(mm_dtype),
                     preferred_element_type=jnp.float32)             # (Bt, S, C)
    res = gamma * out + y
    # NOTE: with C < 128 the lane dim is under-filled on loads/stores; packing W into
    # the lane dim would need an in-kernel minor-dim reshape (full relayout) and is
    # intentionally not done.
    o_ref[...] = res.reshape(Bt, H, W, C).astype(o_ref.dtype)


def _vmem_capacity_bytes():
    try:
        return int(pltpu.get_tpu_info().vmem_capacity_bytes)
    except Exception:
        return 64 << 20   # v7x floor -> conservative everywhere


def _plan_tiles(B, H, W, C, vmem_cap):
    """VMEM-byte-budget batch-tile planning.

    Working set per grid step ~ _COPIES f32 copies of the (bt,H,W,C) tile (x, the
    three pointwise outputs, k rolled cols, row partials, dw scratch, y, CAM temps,
    result, plus double-buffered in/out HBM blocks).  bt is capped at B//2 so the
    "parallel" batch axis has >= 2 steps (v7x megacore sharding); otherwise we take
    the largest fitting divisor so matmul M stays large (v6e).
    """
    _COPIES = 26
    tile_bytes = H * W * C * 4
    budget = int(vmem_cap * 0.45)
    cap_bt = max(1, B // 2)
    bt = 1
    for d in range(cap_bt, 0, -1):
        if B % d:
            continue
        if d * H * W <= 4096 and d * tile_bytes * _COPIES <= budget:
            bt = d
            break
    step_bytes = (bt * tile_bytes * _COPIES          # tile-sized temporaries + I/O bufs
                  + bt * C * C * 4 * 3               # CAM energy / exp / attn
                  + (3 * C * C + 40 * C) * 4)        # weights / biases / taps
    vmem_limit = int(min(vmem_cap * 0.9, max(32 << 20, step_bytes * 1.6)))
    return bt, vmem_limit


def feature_extractor_nhwc(x, p, *, matmul_dtype=jnp.float32):
    """Core entry point.  x: (B, H, W, C) float32, C == FeatureExtractor.out_channel.

    matmul_dtype=jnp.bfloat16 runs the MXU matmuls (fused pointwise convs + both CAM
    einsums) with bf16 operands and f32 accumulation — the native MXU fast path on
    v5e, v6e and v7x alike (f32 matmuls are emulated via multiple bf16 passes).  All
    elementwise math stays f32.  The CAM softmax amplifies operand rounding, so
    validate bf16 accuracy for your model before enabling it.
    """
    B, H, W, C = x.shape

    # Train-mode BatchNorm (batch stats over B,H,W; biased variance) folded into a
    # per-channel affine, then folded straight into the 1x1 conv weights/biases.
    mean = jnp.mean(x, axis=(0, 1, 2))
    var = jnp.var(x, axis=(0, 1, 2))

    def fold(bw, bb, w_oi):
        # (x * s + b) @ W  ==  x @ (diag(s) @ W)  +  b @ W,  with W = w_oi.T [in, out]
        s = bw / jnp.sqrt(var + BN_EPS)
        b = bb - mean * s
        w_io = w_oi.T
        return s[:, None] * w_io, b[None, :] @ w_io

    w1, c1 = fold(p['bn1_w'], p['bn1_b'], p['pw1'])
    w2, c2 = fold(p['bn2_w'], p['bn2_b'], p['pw2'])
    w3, c3 = fold(p['bn3_w'], p['bn3_b'], p['pw3'])
    wcat = jnp.concatenate([w1, w2, w3], axis=1).astype(matmul_dtype)   # (C, 3C)
    bcat = jnp.concatenate([c1, c2, c3], axis=1).astype(jnp.float32)    # (1, 3C)

    # PyTorch depthwise weight (C, k, k) -> (k*k, C)
    dw3 = p['dw3'].reshape(C, 9).T
    dw5 = p['dw5'].reshape(C, 25).T
    b3 = p['dwb3'].reshape(1, C)
    b5 = p['dwb5'].reshape(1, C)
    scal = jnp.concatenate([p['sigma0'], p['sigma1'], p['sigma2'],
                            p['gamma']]).astype(jnp.float32)

    bt, vmem_limit = _plan_tiles(B, H, W, C, _vmem_capacity_bytes())
    grid = (B // bt,)

    in_specs = [
        pl.BlockSpec((bt, H, W, C), lambda b: (b, 0, 0, 0)),          # x
        pl.BlockSpec((C, 3 * C), lambda b: (0, 0)),                   # fused pw weight
        pl.BlockSpec((1, 3 * C), lambda b: (0, 0)),                   # fused pw bias
        pl.BlockSpec((9, C), lambda b: (0, 0)),                       # dw3 taps
        pl.BlockSpec((1, C), lambda b: (0, 0)),                       # dw3 bias
        pl.BlockSpec((25, C), lambda b: (0, 0)),                      # dw5 taps
        pl.BlockSpec((1, C), lambda b: (0, 0)),                       # dw5 bias
        pl.BlockSpec(memory_space=pltpu.MemorySpace.SMEM),            # sigmas + gamma
    ]
    out_spec = pl.BlockSpec((bt, H, W, C), lambda b: (b, 0, 0, 0))

    return pl.pallas_call(
        feature_extractor_kernel,
        out_shape=jax.ShapeDtypeStruct((B, H, W, C), jnp.float32),
        grid_spec=pltpu.PrefetchScalarGridSpec(
            num_scalar_prefetch=0,
            grid=grid,
            in_specs=in_specs,
            out_specs=out_spec,
            scratch_shapes=[pltpu.VMEM((bt, H, W, C), jnp.float32)],
        ),
        compiler_params=pltpu.CompilerParams(
            dimension_semantics=("parallel",),      # batch tiles independent
            vmem_limit_bytes=vmem_limit,
        ),
    )(x, wcat, bcat, dw3, b3, dw5, b5, scal)


def feature_extractor(x_nchw, p, *, matmul_dtype=jnp.float32):
    """PyTorch-convention wrapper: (B, C, H, W) -> (B, C, H, W)."""
    x = jnp.transpose(x_nchw, (0, 2, 3, 1))
    y = feature_extractor_nhwc(x, p, matmul_dtype=matmul_dtype)
    return jnp.transpose(y, (0, 3, 1, 2))


def reference_forward(x, p):
    """Pure-JAX reference of the PyTorch forward (NCHW, train-mode BN)."""
    B, C, H, W = x.shape
    mean = jnp.mean(x, axis=(0, 2, 3), keepdims=True)
    var = jnp.var(x, axis=(0, 2, 3), keepdims=True)

    def bn(xx, w, b):
        return (xx - mean) / jnp.sqrt(var + BN_EPS) * w[None, :, None, None] + b[None, :, None, None]

    def pw(xx, w_oi):
        return jnp.einsum('bihw,oi->bohw', xx, w_oi)

    def dwconv(xx, w_ckk, bias, k):
        pd = k // 2
        xp = jnp.pad(xx, ((0, 0), (0, 0), (pd, pd), (pd, pd)))
        out = jnp.zeros_like(xx)
        for dy in range(k):
            for dx in range(k):
                out = out + xp[:, :, dy:dy + H, dx:dx + W] * w_ckk[None, :, dy, dx, None, None]
        return out + bias[None, :, None, None]

    lrelu = lambda v: jnp.where(v > 0, v, NEG_SLOPE * v)
    s1 = lrelu(pw(bn(x, p['bn1_w'], p['bn1_b']), p['pw1']))
    s2 = lrelu(dwconv(pw(bn(x, p['bn2_w'], p['bn2_b']), p['pw2']), p['dw3'], p['dwb3'], 3))
    s3 = lrelu(dwconv(pw(bn(x, p['bn3_w'], p['bn3_b']), p['pw3']), p['dw5'], p['dwb5'], 5))
    y = p['sigma0'][0] * s1 + p['sigma1'][0] * s2 + p['sigma2'][0] * s3
    yf = y.reshape(B, C, H * W)
    energy = jnp.einsum('bcs,bds->bcd', yf, yf)
    e_new = jnp.max(energy, axis=-1, keepdims=True) - energy
    attn = jax.nn.softmax(e_new, axis=-1)
    out = jnp.einsum('bcd,bds->bcs', attn, yf).reshape(B, C, H, W)
    return p['gamma'][0] * out + y


if __name__ == "__main__":
    def make_params(key, C):
        ks = jax.random.split(key, 13)
        return {
            'bn1_w': 1.0 + 0.1 * jax.random.normal(ks[0], (C,), jnp.float32),
            'bn1_b': 0.1 * jax.random.normal(ks[1], (C,), jnp.float32),
            'bn2_w': 1.0 + 0.1 * jax.random.normal(ks[2], (C,), jnp.float32),
            'bn2_b': 0.1 * jax.random.normal(ks[3], (C,), jnp.float32),
            'bn3_w': 1.0 + 0.1 * jax.random.normal(ks[4], (C,), jnp.float32),
            'bn3_b': 0.1 * jax.random.normal(ks[5], (C,), jnp.float32),
            'pw1': jax.random.normal(ks[6], (C, C), jnp.float32) / np.sqrt(C),
            'pw2': jax.random.normal(ks[7], (C, C), jnp.float32) / np.sqrt(C),
            'pw3': jax.random.normal(ks[8], (C, C), jnp.float32) / np.sqrt(C),
            'dw3': jax.random.normal(ks[9], (C, 3, 3), jnp.float32) / 3.0,
            'dwb3': 0.1 * jax.random.normal(ks[10], (C,), jnp.float32),
            'dw5': jax.random.normal(ks[11], (C, 5, 5), jnp.float32) / 5.0,
            'dwb5': 0.1 * jax.random.normal(ks[12], (C,), jnp.float32),
            'sigma0': jnp.ones((1,), jnp.float32),
            'sigma1': jnp.ones((1,), jnp.float32),
            'sigma2': jnp.ones((1,), jnp.float32),
            'gamma': jnp.zeros((1,), jnp.float32),   # module init
        }

    key = jax.random.PRNGKey(0)
    k0, k1, k2, k3 = jax.random.split(key, 4)

    # ---- Config A: B=2, C=16, 8x8 (bt=1, grid of 2), gamma=0 and gamma!=0 ----
    B, C, H, W = 2, 16, 8, 8
    x = jax.random.normal(k0, (B, C, H, W), jnp.float32)
    p = make_params(k1, C)
    ref_a = np.asarray(reference_forward(x, p))

    y = feature_extractor(x, p)
    jax.block_until_ready(y)
    np.testing.assert_allclose(np.asarray(y), ref_a, rtol=1e-3, atol=1e-3)

    p_g = dict(p, gamma=jnp.full((1,), 0.5, jnp.float32))
    y_g = feature_extractor(x, p_g)
    jax.block_until_ready(y_g)
    np.testing.assert_allclose(np.asarray(y_g), np.asarray(reference_forward(x, p_g)),
                               rtol=1e-3, atol=1e-3)

    # ---- Config B: B=4, C=16, 8x16 (bt=2, grid of 2, rolls span 2 sublane tiles) ----
    B2, C2, H2, W2 = 4, 16, 8, 16
    x2 = jax.random.normal(k2, (B2, C2, H2, W2), jnp.float32)
    p2 = make_params(k3, C2)
    y2 = feature_extractor(x2, p2)
    jax.block_until_ready(y2)
    np.testing.assert_allclose(np.asarray(y2), np.asarray(reference_forward(x2, p2)),
                               rtol=1e-3, atol=1e-3)

    # ---- bf16 matmul-operand fast path (all MXU generations), loose tolerance: the
    # CAM softmax amplifies operand rounding; asserted on the gamma=0 init config ----
    yb = feature_extractor(x, p, matmul_dtype=jnp.bfloat16)
    jax.block_until_ready(yb)
    np.testing.assert_allclose(np.asarray(yb), ref_a, rtol=5e-2, atol=1e-1)

    print("KERNEL_OK")
</pallas_src>

<mosaic_0001>
module attributes {stable_mosaic.version = 11 : i64} {
  func.func @feature_extractor_kernel(%arg0: i32, %arg1: memref<1x8x8x16xf32, #tpu.memory_space<vmem>>, %arg2: memref<16x48xf32, #tpu.memory_space<vmem>>, %arg3: memref<1x48xf32, #tpu.memory_space<vmem>>, %arg4: memref<9x16xf32, #tpu.memory_space<vmem>>, %arg5: memref<1x16xf32, #tpu.memory_space<vmem>>, %arg6: memref<25x16xf32, #tpu.memory_space<vmem>>, %arg7: memref<1x16xf32, #tpu.memory_space<vmem>>, %arg8: memref<4xf32, #tpu.memory_space<smem>>, %arg9: memref<1x8x8x16xf32, #tpu.memory_space<vmem>>, %arg10: memref<1x8x8x16xf32, #tpu.memory_space<vmem>>) attributes {dimension_semantics = [#tpu.dimension_semantics<parallel>], iteration_bounds = array<i64: 2>, scalar_prefetch = 0 : i64, scratch_operands = 1 : i64, tpu.core_type = #tpu.core_type<tc>, window_params = [{transform_indices = @transform_0, window_bounds = array<i64: 1, 8, 8, 16>}, {pipeline_mode = #tpu.pipeline_mode<synchronous>, transform_indices = @transform_1, window_bounds = array<i64: 16, 48>}, {pipeline_mode = #tpu.pipeline_mode<synchronous>, transform_indices = @transform_2, window_bounds = array<i64: 1, 48>}, {pipeline_mode = #tpu.pipeline_mode<synchronous>, transform_indices = @transform_3, window_bounds = array<i64: 9, 16>}, {pipeline_mode = #tpu.pipeline_mode<synchronous>, transform_indices = @transform_4, window_bounds = array<i64: 1, 16>}, {pipeline_mode = #tpu.pipeline_mode<synchronous>, transform_indices = @transform_5, window_bounds = array<i64: 25, 16>}, {pipeline_mode = #tpu.pipeline_mode<synchronous>, transform_indices = @transform_6, window_bounds = array<i64: 1, 16>}, {transform_indices = @transform_7, window_bounds = array<i64: 4>}, {transform_indices = @transform_8, window_bounds = array<i64: 1, 8, 8, 16>}]} {
    %c0 = arith.constant 0 : index
    %c0_0 = arith.constant 0 : index
    %c0_1 = arith.constant 0 : index
    %c0_2 = arith.constant 0 : index
    %0 = vector.load %arg1[%c0, %c0_0, %c0_1, %c0_2] : memref<1x8x8x16xf32, #tpu.memory_space<vmem>>, vector<1x8x8x16xf32>
    %1 = vector.shape_cast %0 : vector<1x8x8x16xf32> to vector<64x16xf32>
    %c0_3 = arith.constant 0 : index
    %c0_4 = arith.constant 0 : index
    %2 = vector.load %arg2[%c0_3, %c0_4] : memref<16x48xf32, #tpu.memory_space<vmem>>, vector<16x48xf32>
    %c0_5 = arith.constant 0 : index
    %c0_6 = arith.constant 0 : index
    %3 = vector.load %arg3[%c0_5, %c0_6] : memref<1x48xf32, #tpu.memory_space<vmem>>, vector<1x48xf32>
    %4 = vector.extract_strided_slice %2 {offsets = [0, 0], sizes = [16, 16], strides = [1, 1]} : vector<16x48xf32> to vector<16x16xf32>
    %cst = arith.constant dense<0.000000e+00> : vector<64x16xf32>
    %5 = tpu.matmul %1, %4, %cst {dimension_numbers = #tpu.dot_dimension_numbers<[1], [0], [0], [1], [0, 0, 1, 1], [], []>} : vector<64x16xf32>, vector<16x16xf32>, vector<64x16xf32> -> vector<64x16xf32>
    %6 = vector.extract_strided_slice %3 {offsets = [0, 0], sizes = [1, 16], strides = [1, 1]} : vector<1x48xf32> to vector<1x16xf32>
    %7 = vector.broadcast %6 : vector<1x16xf32> to vector<64x16xf32>
    %8 = arith.addf %5, %7 : vector<64x16xf32>
    %cst_7 = arith.constant 0.000000e+00 : f32
    %9 = vector.broadcast %cst_7 : f32 to vector<64x16xf32>
    %10 = arith.cmpf ogt, %8, %9 : vector<64x16xf32>
    %cst_8 = arith.constant 0.00999999977 : f32
    %11 = vector.broadcast %cst_8 : f32 to vector<64x16xf32>
    %12 = arith.mulf %11, %8 : vector<64x16xf32>
    %13 = arith.select %10, %8, %12 : vector<64x16xi1>, vector<64x16xf32>
    %14 = vector.extract_strided_slice %2 {offsets = [0, 16], sizes = [16, 16], strides = [1, 1]} : vector<16x48xf32> to vector<16x16xf32>
    %cst_9 = arith.constant dense<0.000000e+00> : vector<64x16xf32>
    %15 = tpu.matmul %1, %14, %cst_9 {dimension_numbers = #tpu.dot_dimension_numbers<[1], [0], [0], [1], [0, 0, 1, 1], [], []>} : vector<64x16xf32>, vector<16x16xf32>, vector<64x16xf32> -> vector<64x16xf32>
    %16 = vector.extract_strided_slice %3 {offsets = [0, 16], sizes = [1, 16], strides = [1, 1]} : vector<1x48xf32> to vector<1x16xf32>
    %17 = vector.broadcast %16 : vector<1x16xf32> to vector<64x16xf32>
    %18 = arith.addf %15, %17 : vector<64x16xf32>
    %19 = vector.extract_strided_slice %2 {offsets = [0, 32], sizes = [16, 16], strides = [1, 1]} : vector<16x48xf32> to vector<16x16xf32>
    %cst_10 = arith.constant dense<0.000000e+00> : vector<64x16xf32>
    %20 = tpu.matmul %1, %19, %cst_10 {dimension_numbers = #tpu.dot_dimension_numbers<[1], [0], [0], [1], [0, 0, 1, 1], [], []>} : vector<64x16xf32>, vector<16x16xf32>, vector<64x16xf32> -> vector<64x16xf32>
    %21 = vector.extract_strided_slice %3 {offsets = [0, 32], sizes = [1, 16], strides = [1, 1]} : vector<1x48xf32> to vector<1x16xf32>
    %22 = vector.broadcast %21 : vector<1x16xf32> to vector<64x16xf32>
    %23 = arith.addf %20, %22 : vector<64x16xf32>
    %24 = vector.shape_cast %13 : vector<64x16xf32> to vector<1x64x16xf32>
    %25 = vector.shape_cast %18 : vector<64x16xf32> to vector<1x8x8x16xf32>
    %26 = vector.shape_cast %23 : vector<64x16xf32> to vector<1x8x8x16xf32>
    %27 = tpu.iota {dimensions = array<i32: 2>} : vector<1x1x8x1xi32>
    %c0_11 = arith.constant 0 : index
    %c0_12 = arith.constant 0 : index
    %28 = vector.load %arg4[%c0_11, %c0_12] : memref<9x16xf32, #tpu.memory_space<vmem>>, vector<9x16xf32>
    %c0_13 = arith.constant 0 : index
    %c0_14 = arith.constant 0 : index
    %29 = vector.load %arg5[%c0_13, %c0_14] : memref<1x16xf32, #tpu.memory_space<vmem>>, vector<1x16xf32>
    %30 = vector.shape_cast %29 : vector<1x16xf32> to vector<1x1x1x16xf32>
    %c1_i32 = arith.constant 1 : i32
    %31 = tpu.dynamic_rotate %25 by %c1_i32 dim 2 : vector<1x8x8x16xf32>, i32 -> vector<1x8x8x16xf32>
    %c1_i32_15 = arith.constant 1 : i32
    %32 = vector.broadcast %c1_i32_15 : i32 to vector<1x1x8x1xi32>
    %33 = arith.cmpi sge, %27, %32 : vector<1x1x8x1xi32>
    %cst_16 = arith.constant 0.000000e+00 : f32
    %34 = vector.shape_cast %33 : vector<1x1x8x1xi1> to vector<1x1x8x1xi1>
    %35 = vector.broadcast %34 : vector<1x1x8x1xi1> to vector<1x8x8x16xi1>
    %36 = vector.broadcast %cst_16 : f32 to vector<1x8x8x16xf32>
    %37 = arith.select %35, %31, %36 : vector<1x8x8x16xi1>, vector<1x8x8x16xf32>
    %c7_i32 = arith.constant 7 : i32
    %38 = tpu.dynamic_rotate %25 by %c7_i32 dim 2 : vector<1x8x8x16xf32>, i32 -> vector<1x8x8x16xf32>
    %c7_i32_17 = arith.constant 7 : i32
    %39 = vector.broadcast %c7_i32_17 : i32 to vector<1x1x8x1xi32>
    %40 = arith.cmpi slt, %27, %39 : vector<1x1x8x1xi32>
    %cst_18 = arith.constant 0.000000e+00 : f32
    %41 = vector.shape_cast %40 : vector<1x1x8x1xi1> to vector<1x1x8x1xi1>
    %42 = vector.broadcast %41 : vector<1x1x8x1xi1> to vector<1x8x8x16xi1>
    %43 = vector.broadcast %cst_18 : f32 to vector<1x8x8x16xf32>
    %44 = arith.select %42, %38, %43 : vector<1x8x8x16xi1>, vector<1x8x8x16xf32>
    %45 = vector.extract_strided_slice %28 {offsets = [3, 0], sizes = [1, 16], strides = [1, 1]} : vector<9x16xf32> to vector<1x16xf32>
    %46 = vector.shape_cast %45 : vector<1x16xf32> to vector<16xf32>
    %47 = vector.shape_cast %46 : vector<16xf32> to vector<1x1x1x16xf32>
    %48 = vector.broadcast %47 : vector<1x1x1x16xf32> to vector<1x8x8x16xf32>
    %49 = arith.mulf %37, %48 : vector<1x8x8x16xf32>
    %50 = vector.extract_strided_slice %28 {offsets = [4, 0], sizes = [1, 16], strides = [1, 1]} : vector<9x16xf32> to vector<1x16xf32>
    %51 = vector.shape_cast %50 : vector<1x16xf32> to vector<16xf32>
    %52 = vector.shape_cast %51 : vector<16xf32> to vector<1x1x1x16xf32>
    %53 = vector.broadcast %52 : vector<1x1x1x16xf32> to vector<1x8x8x16xf32>
    %54 = arith.mulf %25, %53 : vector<1x8x8x16xf32>
    %55 = arith.addf %49, %54 : vector<1x8x8x16xf32>
    %56 = vector.extract_strided_slice %28 {offsets = [5, 0], sizes = [1, 16], strides = [1, 1]} : vector<9x16xf32> to vector<1x16xf32>
    %57 = vector.shape_cast %56 : vector<1x16xf32> to vector<16xf32>
    %58 = vector.shape_cast %57 : vector<16xf32> to vector<1x1x1x16xf32>
    %59 = vector.broadcast %58 : vector<1x1x1x16xf32> to vector<1x8x8x16xf32>
    %60 = arith.mulf %44, %59 : vector<1x8x8x16xf32>
    %61 = arith.addf %55, %60 : vector<1x8x8x16xf32>
    %62 = vector.broadcast %30 : vector<1x1x1x16xf32> to vector<1x8x8x16xf32>
    %63 = arith.addf %61, %62 : vector<1x8x8x16xf32>
    %c0_19 = arith.constant 0 : index
    %c0_20 = arith.constant 0 : index
    %c0_21 = arith.constant 0 : index
    %c0_22 = arith.constant 0 : index
    %64 = vector.load %arg10[%c0_19, %c0_20, %c0_21, %c0_22] : memref<1x8x8x16xf32, #tpu.memory_space<vmem>>, vector<1x8x8x16xf32>
    tpu.vector_store %arg10[%c0_19, %c0_20, %c0_21, %c0_22], %63 {strides = array<i32>} : memref<1x8x8x16xf32, #tpu.memory_space<vmem>>, vector<1x8x8x16xf32>,
    %65 = vector.extract_strided_slice %28 {offsets = [0, 0], sizes = [1, 16], strides = [1, 1]} : vector<9x16xf32> to vector<1x16xf32>
    %66 = vector.shape_cast %65 : vector<1x16xf32> to vector<16xf32>
    %67 = vector.shape_cast %66 : vector<16xf32> to vector<1x1x1x16xf32>
    %68 = vector.broadcast %67 : vector<1x1x1x16xf32> to vector<1x8x8x16xf32>
    %69 = arith.mulf %37, %68 : vector<1x8x8x16xf32>
    %70 = vector.extract_strided_slice %28 {offsets = [1, 0], sizes = [1, 16], strides = [1, 1]} : vector<9x16xf32> to vector<1x16xf32>
    %71 = vector.shape_cast %70 : vector<1x16xf32> to vector<16xf32>
    %72 = vector.shape_cast %71 : vector<16xf32> to vector<1x1x1x16xf32>
    %73 = vector.broadcast %72 : vector<1x1x1x16xf32> to vector<1x8x8x16xf32>
    %74 = arith.mulf %25, %73 : vector<1x8x8x16xf32>
    %75 = arith.addf %69, %74 : vector<1x8x8x16xf32>
    %76 = vector.extract_strided_slice %28 {offsets = [2, 0], sizes = [1, 16], strides = [1, 1]} : vector<9x16xf32> to vector<1x16xf32>
    %77 = vector.shape_cast %76 : vector<1x16xf32> to vector<16xf32>
    %78 = vector.shape_cast %77 : vector<16xf32> to vector<1x1x1x16xf32>
    %79 = vector.broadcast %78 : vector<1x1x1x16xf32> to vector<1x8x8x16xf32>
    %80 = arith.mulf %44, %79 : vector<1x8x8x16xf32>
    %81 = arith.addf %75, %80 : vector<1x8x8x16xf32>
    %c0_23 = arith.constant 0 : index
    %c1 = arith.constant 1 : index
    %c0_24 = arith.constant 0 : index
    %c0_25 = arith.constant 0 : index
    %82 = vector.load %arg10[%c0_23, %c1, %c0_24, %c0_25] : memref<1x8x8x16xf32, #tpu.memory_space<vmem>>, vector<1x7x8x16xf32>
    %83 = vector.extract_strided_slice %81 {offsets = [0, 0, 0, 0], sizes = [1, 7, 8, 16], strides = [1, 1, 1, 1]} : vector<1x8x8x16xf32> to vector<1x7x8x16xf32>
    %84 = arith.addf %82, %83 : vector<1x7x8x16xf32>
    %c0_26 = arith.constant 0 : index
    %c1_27 = arith.constant 1 : index
    %c0_28 = arith.constant 0 : index
    %c0_29 = arith.constant 0 : index
    %85 = vector.load %arg10[%c0_26, %c1_27, %c0_28, %c0_29] : memref<1x8x8x16xf32, #tpu.memory_space<vmem>>, vector<1x7x8x16xf32>
    tpu.vector_store %arg10[%c0_26, %c1_27, %c0_28, %c0_29], %84 {strides = array<i32>} : memref<1x8x8x16xf32, #tpu.memory_space<vmem>>, vector<1x7x8x16xf32>,
    %86 = vector.extract_strided_slice %28 {offsets = [6, 0], sizes = [1, 16], strides = [1, 1]} : vector<9x16xf32> to vector<1x16xf32>
    %87 = vector.shape_cast %86 : vector<1x16xf32> to vector<16xf32>
    %88 = vector.shape_cast %87 : vector<16xf32> to vector<1x1x1x16xf32>
    %89 = vector.broadcast %88 : vector<1x1x1x16xf32> to vector<1x8x8x16xf32>
    %90 = arith.mulf %37, %89 : vector<1x8x8x16xf32>
    %91 = vector.extract_strided_slice %28 {offsets = [7, 0], sizes = [1, 16], strides = [1, 1]} : vector<9x16xf32> to vector<1x16xf32>
    %92 = vector.shape_cast %91 : vector<1x16xf32> to vector<16xf32>
    %93 = vector.shape_cast %92 : vector<16xf32> to vector<1x1x1x16xf32>
    %94 = vector.broadcast %93 : vector<1x1x1x16xf32> to vector<1x8x8x16xf32>
    %95 = arith.mulf %25, %94 : vector<1x8x8x16xf32>
    %96 = arith.addf %90, %95 : vector<1x8x8x16xf32>
    %97 = vector.extract_strided_slice %28 {offsets = [8, 0], sizes = [1, 16], strides = [1, 1]} : vector<9x16xf32> to vector<1x16xf32>
    %98 = vector.shape_cast %97 : vector<1x16xf32> to vector<16xf32>
    %99 = vector.shape_cast %98 : vector<16xf32> to vector<1x1x1x16xf32>
    %100 = vector.broadcast %99 : vector<1x1x1x16xf32> to vector<1x8x8x16xf32>
    %101 = arith.mulf %44, %100 : vector<1x8x8x16xf32>
    %102 = arith.addf %96, %101 : vector<1x8x8x16xf32>
    %c0_30 = arith.constant 0 : index
    %c0_31 = arith.constant 0 : index
    %c0_32 = arith.constant 0 : index
    %c0_33 = arith.constant 0 : index
    %103 = vector.load %arg10[%c0_30, %c0_31, %c0_32, %c0_33] : memref<1x8x8x16xf32, #tpu.memory_space<vmem>>, vector<1x7x8x16xf32>
    %104 = vector.extract_strided_slice %102 {offsets = [0, 1, 0, 0], sizes = [1, 7, 8, 16], strides = [1, 1, 1, 1]} : vector<1x8x8x16xf32> to vector<1x7x8x16xf32>
    %105 = arith.addf %103, %104 : vector<1x7x8x16xf32>
    %c0_34 = arith.constant 0 : index
    %c0_35 = arith.constant 0 : index
    %c0_36 = arith.constant 0 : index
    %c0_37 = arith.constant 0 : index
    %106 = vector.load %arg10[%c0_34, %c0_35, %c0_36, %c0_37] : memref<1x8x8x16xf32, #tpu.memory_space<vmem>>, vector<1x7x8x16xf32>
    tpu.vector_store %arg10[%c0_34, %c0_35, %c0_36, %c0_37], %105 {strides = array<i32>} : memref<1x8x8x16xf32, #tpu.memory_space<vmem>>, vector<1x7x8x16xf32>,
    %c0_38 = arith.constant 0 : index
    %c0_39 = arith.constant 0 : index
    %c0_40 = arith.constant 0 : index
    %c0_41 = arith.constant 0 : index
    %107 = vector.load %arg10[%c0_38, %c0_39, %c0_40, %c0_41] : memref<1x8x8x16xf32, #tpu.memory_space<vmem>>, vector<1x8x8x16xf32>
    %cst_42 = arith.constant 0.000000e+00 : f32
    %108 = vector.broadcast %cst_42 : f32 to vector<1x8x8x16xf32>
    %109 = arith.cmpf ogt, %107, %108 : vector<1x8x8x16xf32>
    %cst_43 = arith.constant 0.00999999977 : f32
    %110 = vector.broadcast %cst_43 : f32 to vector<1x8x8x16xf32>
    %111 = arith.mulf %110, %107 : vector<1x8x8x16xf32>
    %112 = arith.select %109, %107, %111 : vector<1x8x8x16xi1>, vector<1x8x8x16xf32>
    %113 = vector.shape_cast %112 : vector<1x8x8x16xf32> to vector<1x64x16xf32>
    %c0_44 = arith.constant 0 : index
    %c0_45 = arith.constant 0 : index
    %114 = vector.load %arg6[%c0_44, %c0_45] : memref<25x16xf32, #tpu.memory_space<vmem>>, vector<25x16xf32>
    %c0_46 = arith.constant 0 : index
    %c0_47 = arith.constant 0 : index
    %115 = vector.load %arg7[%c0_46, %c0_47] : memref<1x16xf32, #tpu.memory_space<vmem>>, vector<1x16xf32>
    %116 = vector.shape_cast %115 : vector<1x16xf32> to vector<1x1x1x16xf32>
    %c2_i32 = arith.constant 2 : i32
    %117 = tpu.dynamic_rotate %26 by %c2_i32 dim 2 : vector<1x8x8x16xf32>, i32 -> vector<1x8x8x16xf32>
    %c2_i32_48 = arith.constant 2 : i32
    %118 = vector.broadcast %c2_i32_48 : i32 to vector<1x1x8x1xi32>
    %119 = arith.cmpi sge, %27, %118 : vector<1x1x8x1xi32>
    %cst_49 = arith.constant 0.000000e+00 : f32
    %120 = vector.shape_cast %119 : vector<1x1x8x1xi1> to vector<1x1x8x1xi1>
    %121 = vector.broadcast %120 : vector<1x1x8x1xi1> to vector<1x8x8x16xi1>
    %122 = vector.broadcast %cst_49 : f32 to vector<1x8x8x16xf32>
    %123 = arith.select %121, %117, %122 : vector<1x8x8x16xi1>, vector<1x8x8x16xf32>
    %c1_i32_50 = arith.constant 1 : i32
    %124 = tpu.dynamic_rotate %26 by %c1_i32_50 dim 2 : vector<1x8x8x16xf32>, i32 -> vector<1x8x8x16xf32>
    %c1_i32_51 = arith.constant 1 : i32
    %125 = vector.broadcast %c1_i32_51 : i32 to vector<1x1x8x1xi32>
    %126 = arith.cmpi sge, %27, %125 : vector<1x1x8x1xi32>
    %cst_52 = arith.constant 0.000000e+00 : f32
    %127 = vector.shape_cast %126 : vector<1x1x8x1xi1> to vector<1x1x8x1xi1>
    %128 = vector.broadcast %127 : vector<1x1x8x1xi1> to vector<1x8x8x16xi1>
    %129 = vector.broadcast %cst_52 : f32 to vector<1x8x8x16xf32>
    %130 = arith.select %128, %124, %129 : vector<1x8x8x16xi1>, vector<1x8x8x16xf32>
    %c7_i32_53 = arith.constant 7 : i32
    %131 = tpu.dynamic_rotate %26 by %c7_i32_53 dim 2 : vector<1x8x8x16xf32>, i32 -> vector<1x8x8x16xf32>
    %c7_i32_54 = arith.constant 7 : i32
    %132 = vector.broadcast %c7_i32_54 : i32 to vector<1x1x8x1xi32>
    %133 = arith.cmpi slt, %27, %132 : vector<1x1x8x1xi32>
    %cst_55 = arith.constant 0.000000e+00 : f32
    %134 = vector.shape_cast %133 : vector<1x1x8x1xi1> to vector<1x1x8x1xi1>
    %135 = vector.broadcast %134 : vector<1x1x8x1xi1> to vector<1x8x8x16xi1>
    %136 = vector.broadcast %cst_55 : f32 to vector<1x8x8x16xf32>
    %137 = arith.select %135, %131, %136 : vector<1x8x8x16xi1>, vector<1x8x8x16xf32>
    %c6_i32 = arith.constant 6 : i32
    %138 = tpu.dynamic_rotate %26 by %c6_i32 dim 2 : vector<1x8x8x16xf32>, i32 -> vector<1x8x8x16xf32>
    %c6_i32_56 = arith.constant 6 : i32
    %139 = vector.broadcast %c6_i32_56 : i32 to vector<1x1x8x1xi32>
    %140 = arith.cmpi slt, %27, %139 : vector<1x1x8x1xi32>
    %cst_57 = arith.constant 0.000000e+00 : f32
    %141 = vector.shape_cast %140 : vector<1x1x8x1xi1> to vector<1x1x8x1xi1>
    %142 = vector.broadcast %141 : vector<1x1x8x1xi1> to vector<1x8x8x16xi1>
    %143 = vector.broadcast %cst_57 : f32 to vector<1x8x8x16xf32>
    %144 = arith.select %142, %138, %143 : vector<1x8x8x16xi1>, vector<1x8x8x16xf32>
    %145 = vector.extract_strided_slice %114 {offsets = [10, 0], sizes = [1, 16], strides = [1, 1]} : vector<25x16xf32> to vector<1x16xf32>
    %146 = vector.shape_cast %145 : vector<1x16xf32> to vector<16xf32>
    %147 = vector.shape_cast %146 : vector<16xf32> to vector<1x1x1x16xf32>
    %148 = vector.broadcast %147 : vector<1x1x1x16xf32> to vector<1x8x8x16xf32>
    %149 = arith.mulf %123, %148 : vector<1x8x8x16xf32>
    %150 = vector.extract_strided_slice %114 {offsets = [11, 0], sizes = [1, 16], strides = [1, 1]} : vector<25x16xf32> to vector<1x16xf32>
    %151 = vector.shape_cast %150 : vector<1x16xf32> to vector<16xf32>
    %152 = vector.shape_cast %151 : vector<16xf32> to vector<1x1x1x16xf32>
    %153 = vector.broadcast %152 : vector<1x1x1x16xf32> to vector<1x8x8x16xf32>
    %154 = arith.mulf %130, %153 : vector<1x8x8x16xf32>
    %155 = arith.addf %149, %154 : vector<1x8x8x16xf32>
    %156 = vector.extract_strided_slice %114 {offsets = [12, 0], sizes = [1, 16], strides = [1, 1]} : vector<25x16xf32> to vector<1x16xf32>
    %157 = vector.shape_cast %156 : vector<1x16xf32> to vector<16xf32>
    %158 = vector.shape_cast %157 : vector<16xf32> to vector<1x1x1x16xf32>
    %159 = vector.broadcast %158 : vector<1x1x1x16xf32> to vector<1x8x8x16xf32>
    %160 = arith.mulf %26, %159 : vector<1x8x8x16xf32>
    %161 = arith.addf %155, %160 : vector<1x8x8x16xf32>
    %162 = vector.extract_strided_slice %114 {offsets = [13, 0], sizes = [1, 16], strides = [1, 1]} : vector<25x16xf32> to vector<1x16xf32>
    %163 = vector.shape_cast %162 : vector<1x16xf32> to vector<16xf32>
    %164 = vector.shape_cast %163 : vector<16xf32> to vector<1x1x1x16xf32>
    %165 = vector.broadcast %164 : vector<1x1x1x16xf32> to vector<1x8x8x16xf32>
    %166 = arith.mulf %137, %165 : vector<1x8x8x16xf32>
    %167 = arith.addf %161, %166 : vector<1x8x8x16xf32>
    %168 = vector.extract_strided_slice %114 {offsets = [14, 0], sizes = [1, 16], strides = [1, 1]} : vector<25x16xf32> to vector<1x16xf32>
    %169 = vector.shape_cast %168 : vector<1x16xf32> to vector<16xf32>
    %170 = vector.shape_cast %169 : vector<16xf32> to vector<1x1x1x16xf32>
    %171 = vector.broadcast %170 : vector<1x1x1x16xf32> to vector<1x8x8x16xf32>
    %172 = arith.mulf %144, %171 : vector<1x8x8x16xf32>
    %173 = arith.addf %167, %172 : vector<1x8x8x16xf32>
    %174 = vector.broadcast %116 : vector<1x1x1x16xf32> to vector<1x8x8x16xf32>
    %175 = arith.addf %173, %174 : vector<1x8x8x16xf32>
    %c0_58 = arith.constant 0 : index
    %c0_59 = arith.constant 0 : index
    %c0_60 = arith.constant 0 : index
    %c0_61 = arith.constant 0 : index
    %176 = vector.load %arg10[%c0_58, %c0_59, %c0_60, %c0_61] : memref<1x8x8x16xf32, #tpu.memory_space<vmem>>, vector<1x8x8x16xf32>
    tpu.vector_store %arg10[%c0_58, %c0_59, %c0_60, %c0_61], %175 {strides = array<i32>} : memref<1x8x8x16xf32, #tpu.memory_space<vmem>>, vector<1x8x8x16xf32>,
    %177 = vector.extract_strided_slice %114 {offsets = [0, 0], sizes = [1, 16], strides = [1, 1]} : vector<25x16xf32> to vector<1x16xf32>
    %178 = vector.shape_cast %177 : vector<1x16xf32> to vector<16xf32>
    %179 = vector.shape_cast %178 : vector<16xf32> to vector<1x1x1x16xf32>
    %180 = vector.broadcast %179 : vector<1x1x1x16xf32> to vector<1x8x8x16xf32>
    %181 = arith.mulf %123, %180 : vector<1x8x8x16xf32>
    %182 = vector.extract_strided_slice %114 {offsets = [1, 0], sizes = [1, 16], strides = [1, 1]} : vector<25x16xf32> to vector<1x16xf32>
    %183 = vector.shape_cast %182 : vector<1x16xf32> to vector<16xf32>
    %184 = vector.shape_cast %183 : vector<16xf32> to vector<1x1x1x16xf32>
    %185 = vector.broadcast %184 : vector<1x1x1x16xf32> to vector<1x8x8x16xf32>
    %186 = arith.mulf %130, %185 : vector<1x8x8x16xf32>
    %187 = arith.addf %181, %186 : vector<1x8x8x16xf32>
    %188 = vector.extract_strided_slice %114 {offsets = [2, 0], sizes = [1, 16], strides = [1, 1]} : vector<25x16xf32> to vector<1x16xf32>
    %189 = vector.shape_cast %188 : vector<1x16xf32> to vector<16xf32>
    %190 = vector.shape_cast %189 : vector<16xf32> to vector<1x1x1x16xf32>
    %191 = vector.broadcast %190 : vector<1x1x1x16xf32> to vector<1x8x8x16xf32>
    %192 = arith.mulf %26, %191 : vector<1x8x8x16xf32>
    %193 = arith.addf %187, %192 : vector<1x8x8x16xf32>
    %194 = vector.extract_strided_slice %114 {offsets = [3, 0], sizes = [1, 16], strides = [1, 1]} : vector<25x16xf32> to vector<1x16xf32>
    %195 = vector.shape_cast %194 : vector<1x16xf32> to vector<16xf32>
    %196 = vector.shape_cast %195 : vector<16xf32> to vector<1x1x1x16xf32>
    %197 = vector.broadcast %196 : vector<1x1x1x16xf32> to vector<1x8x8x16xf32>
    %198 = arith.mulf %137, %197 : vector<1x8x8x16xf32>
    %199 = arith.addf %193, %198 : vector<1x8x8x16xf32>
    %200 = vector.extract_strided_slice %114 {offsets = [4, 0], sizes = [1, 16], strides = [1, 1]} : vector<25x16xf32> to vector<1x16xf32>
    %201 = vector.shape_cast %200 : vector<1x16xf32> to vector<16xf32>
    %202 = vector.shape_cast %201 : vector<16xf32> to vector<1x1x1x16xf32>
    %203 = vector.broadcast %202 : vector<1x1x1x16xf32> to vector<1x8x8x16xf32>
    %204 = arith.mulf %144, %203 : vector<1x8x8x16xf32>
    %205 = arith.addf %199, %204 : vector<1x8x8x16xf32>
    %c0_62 = arith.constant 0 : index
    %c2 = arith.constant 2 : index
    %c0_63 = arith.constant 0 : index
    %c0_64 = arith.constant 0 : index
    %206 = vector.load %arg10[%c0_62, %c2, %c0_63, %c0_64] : memref<1x8x8x16xf32, #tpu.memory_space<vmem>>, vector<1x6x8x16xf32>
    %207 = vector.extract_strided_slice %205 {offsets = [0, 0, 0, 0], sizes = [1, 6, 8, 16], strides = [1, 1, 1, 1]} : vector<1x8x8x16xf32> to vector<1x6x8x16xf32>
    %208 = arith.addf %206, %207 : vector<1x6x8x16xf32>
    %c0_65 = arith.constant 0 : index
    %c2_66 = arith.constant 2 : index
    %c0_67 = arith.constant 0 : index
    %c0_68 = arith.constant 0 : index
    %209 = vector.load %arg10[%c0_65, %c2_66, %c0_67, %c0_68] : memref<1x8x8x16xf32, #tpu.memory_space<vmem>>, vector<1x6x8x16xf32>
    tpu.vector_store %arg10[%c0_65, %c2_66, %c0_67, %c0_68], %208 {strides = array<i32>} : memref<1x8x8x16xf32, #tpu.memory_space<vmem>>, vector<1x6x8x16xf32>,
    %210 = vector.extract_strided_slice %114 {offsets = [5, 0], sizes = [1, 16], strides = [1, 1]} : vector<25x16xf32> to vector<1x16xf32>
    %211 = vector.shape_cast %210 : vector<1x16xf32> to vector<16xf32>
    %212 = vector.shape_cast %211 : vector<16xf32> to vector<1x1x1x16xf32>
    %213 = vector.broadcast %212 : vector<1x1x1x16xf32> to vector<1x8x8x16xf32>
    %214 = arith.mulf %123, %213 : vector<1x8x8x16xf32>
    %215 = vector.extract_strided_slice %114 {offsets = [6, 0], sizes = [1, 16], strides = [1, 1]} : vector<25x16xf32> to vector<1x16xf32>
    %216 = vector.shape_cast %215 : vector<1x16xf32> to vector<16xf32>
    %217 = vector.shape_cast %216 : vector<16xf32> to vector<1x1x1x16xf32>
    %218 = vector.broadcast %217 : vector<1x1x1x16xf32> to vector<1x8x8x16xf32>
    %219 = arith.mulf %130, %218 : vector<1x8x8x16xf32>
    %220 = arith.addf %214, %219 : vector<1x8x8x16xf32>
    %221 = vector.extract_strided_slice %114 {offsets = [7, 0], sizes = [1, 16], strides = [1, 1]} : vector<25x16xf32> to vector<1x16xf32>
    %222 = vector.shape_cast %221 : vector<1x16xf32> to vector<16xf32>
    %223 = vector.shape_cast %222 : vector<16xf32> to vector<1x1x1x16xf32>
    %224 = vector.broadcast %223 : vector<1x1x1x16xf32> to vector<1x8x8x16xf32>
    %225 = arith.mulf %26, %224 : vector<1x8x8x16xf32>
    %226 = arith.addf %220, %225 : vector<1x8x8x16xf32>
    %227 = vector.extract_strided_slice %114 {offsets = [8, 0], sizes = [1, 16], strides = [1, 1]} : vector<25x16xf32> to vector<1x16xf32>
    %228 = vector.shape_cast %227 : vector<1x16xf32> to vector<16xf32>
    %229 = vector.shape_cast %228 : vector<16xf32> to vector<1x1x1x16xf32>
    %230 = vector.broadcast %229 : vector<1x1x1x16xf32> to vector<1x8x8x16xf32>
    %231 = arith.mulf %137, %230 : vector<1x8x8x16xf32>
    %232 = arith.addf %226, %231 : vector<1x8x8x16xf32>
    %233 = vector.extract_strided_slice %114 {offsets = [9, 0], sizes = [1, 16], strides = [1, 1]} : vector<25x16xf32> to vector<1x16xf32>
    %234 = vector.shape_cast %233 : vector<1x16xf32> to vector<16xf32>
    %235 = vector.shape_cast %234 : vector<16xf32> to vector<1x1x1x16xf32>
    %236 = vector.broadcast %235 : vector<1x1x1x16xf32> to vector<1x8x8x16xf32>
    %237 = arith.mulf %144, %236 : vector<1x8x8x16xf32>
    %238 = arith.addf %232, %237 : vector<1x8x8x16xf32>
    %c0_69 = arith.constant 0 : index
    %c1_70 = arith.constant 1 : index
    %c0_71 = arith.constant 0 : index
    %c0_72 = arith.constant 0 : index
    %239 = vector.load %arg10[%c0_69, %c1_70, %c0_71, %c0_72] : memref<1x8x8x16xf32, #tpu.memory_space<vmem>>, vector<1x7x8x16xf32>
    %240 = vector.extract_strided_slice %238 {offsets = [0, 0, 0, 0], sizes = [1, 7, 8, 16], strides = [1, 1, 1, 1]} : vector<1x8x8x16xf32> to vector<1x7x8x16xf32>
    %241 = arith.addf %239, %240 : vector<1x7x8x16xf32>
    %c0_73 = arith.constant 0 : index
    %c1_74 = arith.constant 1 : index
    %c0_75 = arith.constant 0 : index
    %c0_76 = arith.constant 0 : index
    %242 = vector.load %arg10[%c0_73, %c1_74, %c0_75, %c0_76] : memref<1x8x8x16xf32, #tpu.memory_space<vmem>>, vector<1x7x8x16xf32>
    tpu.vector_store %arg10[%c0_73, %c1_74, %c0_75, %c0_76], %241 {strides = array<i32>} : memref<1x8x8x16xf32, #tpu.memory_space<vmem>>, vector<1x7x8x16xf32>,
    %243 = vector.extract_strided_slice %114 {offsets = [15, 0], sizes = [1, 16], strides = [1, 1]} : vector<25x16xf32> to vector<1x16xf32>
    %244 = vector.shape_cast %243 : vector<1x16xf32> to vector<16xf32>
    %245 = vector.shape_cast %244 : vector<16xf32> to vector<1x1x1x16xf32>
    %246 = vector.broadcast %245 : vector<1x1x1x16xf32> to vector<1x8x8x16xf32>
    %247 = arith.mulf %123, %246 : vector<1x8x8x16xf32>
    %248 = vector.extract_strided_slice %114 {offsets = [16, 0], sizes = [1, 16], strides = [1, 1]} : vector<25x16xf32> to vector<1x16xf32>
    %249 = vector.shape_cast %248 : vector<1x16xf32> to vector<16xf32>
    %250 = vector.shape_cast %249 : vector<16xf32> to vector<1x1x1x16xf32>
    %251 = vector.broadcast %250 : vector<1x1x1x16xf32> to vector<1x8x8x16xf32>
    %252 = arith.mulf %130, %251 : vector<1x8x8x16xf32>
    %253 = arith.addf %247, %252 : vector<1x8x8x16xf32>
    %254 = vector.extract_strided_slice %114 {offsets = [17, 0], sizes = [1, 16], strides = [1, 1]} : vector<25x16xf32> to vector<1x16xf32>
    %255 = vector.shape_cast %254 : vector<1x16xf32> to vector<16xf32>
    %256 = vector.shape_cast %255 : vector<16xf32> to vector<1x1x1x16xf32>
    %257 = vector.broadcast %256 : vector<1x1x1x16xf32> to vector<1x8x8x16xf32>
    %258 = arith.mulf %26, %257 : vector<1x8x8x16xf32>
    %259 = arith.addf %253, %258 : vector<1x8x8x16xf32>
    %260 = vector.extract_strided_slice %114 {offsets = [18, 0], sizes = [1, 16], strides = [1, 1]} : vector<25x16xf32> to vector<1x16xf32>
    %261 = vector.shape_cast %260 : vector<1x16xf32> to vector<16xf32>
    %262 = vector.shape_cast %261 : vector<16xf32> to vector<1x1x1x16xf32>
    %263 = vector.broadcast %262 : vector<1x1x1x16xf32> to vector<1x8x8x16xf32>
    %264 = arith.mulf %137, %263 : vector<1x8x8x16xf32>
    %265 = arith.addf %259, %264 : vector<1x8x8x16xf32>
    %266 = vector.extract_strided_slice %114 {offsets = [19, 0], sizes = [1, 16], strides = [1, 1]} : vector<25x16xf32> to vector<1x16xf32>
    %267 = vector.shape_cast %266 : vector<1x16xf32> to vector<16xf32>
    %268 = vector.shape_cast %267 : vector<16xf32> to vector<1x1x1x16xf32>
    %269 = vector.broadcast %268 : vector<1x1x1x16xf32> to vector<1x8x8x16xf32>
    %270 = arith.mulf %144, %269 : vector<1x8x8x16xf32>
    %271 = arith.addf %265, %270 : vector<1x8x8x16xf32>
    %c0_77 = arith.constant 0 : index
    %c0_78 = arith.constant 0 : index
    %c0_79 = arith.constant 0 : index
    %c0_80 = arith.constant 0 : index
    %272 = vector.load %arg10[%c0_77, %c0_78, %c0_79, %c0_80] : memref<1x8x8x16xf32, #tpu.memory_space<vmem>>, vector<1x7x8x16xf32>
    %273 = vector.extract_strided_slice %271 {offsets = [0, 1, 0, 0], sizes = [1, 7, 8, 16], strides = [1, 1, 1, 1]} : vector<1x8x8x16xf32> to vector<1x7x8x16xf32>
    %274 = arith.addf %272, %273 : vector<1x7x8x16xf32>
    %c0_81 = arith.constant 0 : index
    %c0_82 = arith.constant 0 : index
    %c0_83 = arith.constant 0 : index
    %c0_84 = arith.constant 0 : index
    %275 = vector.load %arg10[%c0_81, %c0_82, %c0_83, %c0_84] : memref<1x8x8x16xf32, #tpu.memory_space<vmem>>, vector<1x7x8x16xf32>
    tpu.vector_store %arg10[%c0_81, %c0_82, %c0_83, %c0_84], %274 {strides = array<i32>} : memref<1x8x8x16xf32, #tpu.memory_space<vmem>>, vector<1x7x8x16xf32>,
    %276 = vector.extract_strided_slice %114 {offsets = [20, 0], sizes = [1, 16], strides = [1, 1]} : vector<25x16xf32> to vector<1x16xf32>
    %277 = vector.shape_cast %276 : vector<1x16xf32> to vector<16xf32>
    %278 = vector.shape_cast %277 : vector<16xf32> to vector<1x1x1x16xf32>
    %279 = vector.broadcast %278 : vector<1x1x1x16xf32> to vector<1x8x8x16xf32>
    %280 = arith.mulf %123, %279 : vector<1x8x8x16xf32>
    %281 = vector.extract_strided_slice %114 {offsets = [21, 0], sizes = [1, 16], strides = [1, 1]} : vector<25x16xf32> to vector<1x16xf32>
    %282 = vector.shape_cast %281 : vector<1x16xf32> to vector<16xf32>
    %283 = vector.shape_cast %282 : vector<16xf32> to vector<1x1x1x16xf32>
    %284 = vector.broadcast %283 : vector<1x1x1x16xf32> to vector<1x8x8x16xf32>
    %285 = arith.mulf %130, %284 : vector<1x8x8x16xf32>
    %286 = arith.addf %280, %285 : vector<1x8x8x16xf32>
    %287 = vector.extract_strided_slice %114 {offsets = [22, 0], sizes = [1, 16], strides = [1, 1]} : vector<25x16xf32> to vector<1x16xf32>
    %288 = vector.shape_cast %287 : vector<1x16xf32> to vector<16xf32>
    %289 = vector.shape_cast %288 : vector<16xf32> to vector<1x1x1x16xf32>
    %290 = vector.broadcast %289 : vector<1x1x1x16xf32> to vector<1x8x8x16xf32>
    %291 = arith.mulf %26, %290 : vector<1x8x8x16xf32>
    %292 = arith.addf %286, %291 : vector<1x8x8x16xf32>
    %293 = vector.extract_strided_slice %114 {offsets = [23, 0], sizes = [1, 16], strides = [1, 1]} : vector<25x16xf32> to vector<1x16xf32>
    %294 = vector.shape_cast %293 : vector<1x16xf32> to vector<16xf32>
    %295 = vector.shape_cast %294 : vector<16xf32> to vector<1x1x1x16xf32>
    %296 = vector.broadcast %295 : vector<1x1x1x16xf32> to vector<1x8x8x16xf32>
    %297 = arith.mulf %137, %296 : vector<1x8x8x16xf32>
    %298 = arith.addf %292, %297 : vector<1x8x8x16xf32>
    %299 = vector.extract_strided_slice %114 {offsets = [24, 0], sizes = [1, 16], strides = [1, 1]} : vector<25x16xf32> to vector<1x16xf32>
    %300 = vector.shape_cast %299 : vector<1x16xf32> to vector<16xf32>
    %301 = vector.shape_cast %300 : vector<16xf32> to vector<1x1x1x16xf32>
    %302 = vector.broadcast %301 : vector<1x1x1x16xf32> to vector<1x8x8x16xf32>
    %303 = arith.mulf %144, %302 : vector<1x8x8x16xf32>
    %304 = arith.addf %298, %303 : vector<1x8x8x16xf32>
    %c0_85 = arith.constant 0 : index
    %c0_86 = arith.constant 0 : index
    %c0_87 = arith.constant 0 : index
    %c0_88 = arith.constant 0 : index
    %305 = vector.load %arg10[%c0_85, %c0_86, %c0_87, %c0_88] : memref<1x8x8x16xf32, #tpu.memory_space<vmem>>, vector<1x6x8x16xf32>
    %306 = vector.extract_strided_slice %304 {offsets = [0, 2, 0, 0], sizes = [1, 6, 8, 16], strides = [1, 1, 1, 1]} : vector<1x8x8x16xf32> to vector<1x6x8x16xf32>
    %307 = arith.addf %305, %306 : vector<1x6x8x16xf32>
    %c0_89 = arith.constant 0 : index
    %c0_90 = arith.constant 0 : index
    %c0_91 = arith.constant 0 : index
    %c0_92 = arith.constant 0 : index
    %308 = vector.load %arg10[%c0_89, %c0_90, %c0_91, %c0_92] : memref<1x8x8x16xf32, #tpu.memory_space<vmem>>, vector<1x6x8x16xf32>
    tpu.vector_store %arg10[%c0_89, %c0_90, %c0_91, %c0_92], %307 {strides = array<i32>} : memref<1x8x8x16xf32, #tpu.memory_space<vmem>>, vector<1x6x8x16xf32>,
    %c0_93 = arith.constant 0 : index
    %c0_94 = arith.constant 0 : index
    %c0_95 = arith.constant 0 : index
    %c0_96 = arith.constant 0 : index
    %309 = vector.load %arg10[%c0_93, %c0_94, %c0_95, %c0_96] : memref<1x8x8x16xf32, #tpu.memory_space<vmem>>, vector<1x8x8x16xf32>
    %cst_97 = arith.constant 0.000000e+00 : f32
    %310 = vector.broadcast %cst_97 : f32 to vector<1x8x8x16xf32>
    %311 = arith.cmpf ogt, %309, %310 : vector<1x8x8x16xf32>
    %cst_98 = arith.constant 0.00999999977 : f32
    %312 = vector.broadcast %cst_98 : f32 to vector<1x8x8x16xf32>
    %313 = arith.mulf %312, %309 : vector<1x8x8x16xf32>
    %314 = arith.select %311, %309, %313 : vector<1x8x8x16xi1>, vector<1x8x8x16xf32>
    %315 = vector.shape_cast %314 : vector<1x8x8x16xf32> to vector<1x64x16xf32>
    %c0_99 = arith.constant 0 : index
    %316 = memref.load %arg8[%c0_99] : memref<4xf32, #tpu.memory_space<smem>>
    %c1_100 = arith.constant 1 : index
    %317 = memref.load %arg8[%c1_100] : memref<4xf32, #tpu.memory_space<smem>>
    %c2_101 = arith.constant 2 : index
    %318 = memref.load %arg8[%c2_101] : memref<4xf32, #tpu.memory_space<smem>>
    %c3 = arith.constant 3 : index
    %319 = memref.load %arg8[%c3] : memref<4xf32, #tpu.memory_space<smem>>
    %320 = vector.broadcast %316 : f32 to vector<1x64x16xf32>
    %321 = arith.mulf %320, %24 : vector<1x64x16xf32>
    %322 = vector.broadcast %317 : f32 to vector<1x64x16xf32>
    %323 = arith.mulf %322, %113 : vector<1x64x16xf32>
    %324 = arith.addf %321, %323 : vector<1x64x16xf32>
    %325 = vector.broadcast %318 : f32 to vector<1x64x16xf32>
    %326 = arith.mulf %325, %315 : vector<1x64x16xf32>
    %327 = arith.addf %324, %326 : vector<1x64x16xf32>
    "tpu.trace_start"() <{level = 10 : i32, message = "bsc,bsd->bcd"}> : () -> ()
    %cst_102 = arith.constant dense<0.000000e+00> : vector<1x16x16xf32>
    %328 = tpu.matmul %327, %327, %cst_102 {dimension_numbers = #tpu.dot_dimension_numbers<[1], [1], [2], [2], [0, 0, 0, 2, 1, 2], [0], [0]>} : vector<1x64x16xf32>, vector<1x64x16xf32>, vector<1x16x16xf32> -> vector<1x16x16xf32>
    "tpu.trace_stop"() : () -> ()
    %cst_103 = arith.constant dense<0x7F800000> : vector<1x16xf32>
    %329 = vector.multi_reduction <minimumf>, %328, %cst_103 [2] : vector<1x16x16xf32> to vector<1x16xf32>
    %330 = vector.shape_cast %329 : vector<1x16xf32> to vector<1x16x1xf32>
    %331 = vector.broadcast %330 : vector<1x16x1xf32> to vector<1x16x16xf32>
    %332 = arith.subf %331, %328 : vector<1x16x16xf32>
    %333 = math.exp %332 : vector<1x16x16xf32>
    %cst_104 = arith.constant dense<0.000000e+00> : vector<1x16xf32>
    %334 = vector.multi_reduction <add>, %333, %cst_104 [2] : vector<1x16x16xf32> to vector<1x16xf32>
    %335 = vector.shape_cast %334 : vector<1x16xf32> to vector<1x16x1xf32>
    %336 = tpu.reciprocal %335 : vector<1x16x1xf32> -> vector<1x16x1xf32>
    %337 = vector.broadcast %336 : vector<1x16x1xf32> to vector<1x16x16xf32>
    %338 = arith.mulf %333, %337 : vector<1x16x16xf32>
    "tpu.trace_start"() <{level = 10 : i32, message = "bsd,bcd->bsc"}> : () -> ()
    %cst_105 = arith.constant dense<0.000000e+00> : vector<1x64x16xf32>
    %339 = tpu.matmul %327, %338, %cst_105 {dimension_numbers = #tpu.dot_dimension_numbers<[2], [2], [1], [1], [0, 0, 0, 1, 1, 1], [0], [0]>} : vector<1x64x16xf32>, vector<1x16x16xf32>, vector<1x64x16xf32> -> vector<1x64x16xf32>
    "tpu.trace_stop"() : () -> ()
    %340 = vector.broadcast %319 : f32 to vector<1x64x16xf32>
    %341 = arith.mulf %340, %339 : vector<1x64x16xf32>
    %342 = arith.addf %341, %327 : vector<1x64x16xf32>
    %343 = vector.shape_cast %342 : vector<1x64x16xf32> to vector<1x8x8x16xf32>
    %c0_106 = arith.constant 0 : index
    %c0_107 = arith.constant 0 : index
    %c0_108 = arith.constant 0 : index
    %c0_109 = arith.constant 0 : index
    %344 = vector.load %arg9[%c0_106, %c0_107, %c0_108, %c0_109] : memref<1x8x8x16xf32, #tpu.memory_space<vmem>>, vector<1x8x8x16xf32>
    tpu.vector_store %arg9[%c0_106, %c0_107, %c0_108, %c0_109], %343 {strides = array<i32>} : memref<1x8x8x16xf32, #tpu.memory_space<vmem>>, vector<1x8x8x16xf32>,
    return
  }
  func.func @transform_0(%arg0: i32) -> (i32, i32, i32, i32) {
    %c0_i32 = arith.constant 0 : i32
    %c0_i32_0 = arith.constant 0 : i32
    %c0_i32_1 = arith.constant 0 : i32
    %c0_i32_2 = arith.constant 0 : i32
    return %arg0, %c0_i32, %c0_i32_0, %c0_i32_1 : i32, i32, i32, i32
  }
  func.func @transform_1(%arg0: i32) -> (i32, i32) {
    %c0_i32 = arith.constant 0 : i32
    %c0_i32_0 = arith.constant 0 : i32
    %c0_i32_1 = arith.constant 0 : i32
    return %c0_i32, %c0_i32_0 : i32, i32
  }
  func.func @transform_2(%arg0: i32) -> (i32, i32) {
    %c0_i32 = arith.constant 0 : i32
    %c0_i32_0 = arith.constant 0 : i32
    %c0_i32_1 = arith.constant 0 : i32
    return %c0_i32, %c0_i32_0 : i32, i32
  }
  func.func @transform_3(%arg0: i32) -> (i32, i32) {
    %c0_i32 = arith.constant 0 : i32
    %c0_i32_0 = arith.constant 0 : i32
    %c0_i32_1 = arith.constant 0 : i32
    return %c0_i32, %c0_i32_0 : i32, i32
  }
  func.func @transform_4(%arg0: i32) -> (i32, i32) {
    %c0_i32 = arith.constant 0 : i32
    %c0_i32_0 = arith.constant 0 : i32
    %c0_i32_1 = arith.constant 0 : i32
    return %c0_i32, %c0_i32_0 : i32, i32
  }
  func.func @transform_5(%arg0: i32) -> (i32, i32) {
    %c0_i32 = arith.constant 0 : i32
    %c0_i32_0 = arith.constant 0 : i32
    %c0_i32_1 = arith.constant 0 : i32
    return %c0_i32, %c0_i32_0 : i32, i32
  }
  func.func @transform_6(%arg0: i32) -> (i32, i32) {
    %c0_i32 = arith.constant 0 : i32
    %c0_i32_0 = arith.constant 0 : i32
    %c0_i32_1 = arith.constant 0 : i32
    return %c0_i32, %c0_i32_0 : i32, i32
  }
  func.func @transform_7(%arg0: i32) -> i32 {
    %c0_i32 = arith.constant 0 : i32
    %c0_i32_0 = arith.constant 0 : i32
    return %c0_i32 : i32
  }
  func.func @transform_8(%arg0: i32) -> (i32, i32, i32, i32) {
    %c0_i32 = arith.constant 0 : i32
    %c0_i32_0 = arith.constant 0 : i32
    %c0_i32_1 = arith.constant 0 : i32
    %c0_i32_2 = arith.constant 0 : i32
    return %arg0, %c0_i32, %c0_i32_0, %c0_i32_1 : i32, i32, i32, i32
  }
}

</mosaic_0001>

<llo_original>
// kernel: tpu_custom_call.1
$region0: #{tpu_custom_call.1}
  #allocation0 [shape = 'u32[]', space=smem, size = 0x4, offset = 0x4, fixed_abs, tag = 'smem constant byte address 0x4 - core index']
  #allocation1 [shape = 'u32[144,128]{1,0:T(1,128)}', space=vmem, size = 0x12000, scoped, tag = 'internal scratch']
  #allocation2 [shape = 'f32[1,8,8,16]{3,2,1,0:T(8,128)}', space=vmem, size = 0x8000, scoped, tag = 'scratch operand']
  %s0 = inlined_call_operand.hbm [shape: f32[2,8,8,16], index: 0, kind: input, shape index: {}]
  %s1 = inlined_call_operand.vmem [shape: f32[16,48], index: 1, kind: input, shape index: {}]
  %s2 = inlined_call_operand.vmem [shape: f32[1,48], index: 2, kind: input, shape index: {}]
  %s3 = inlined_call_operand.vmem [shape: f32[9,16], index: 3, kind: input, shape index: {}]
  %s4 = inlined_call_operand.vmem [shape: f32[1,16], index: 4, kind: input, shape index: {}]
  %s5 = inlined_call_operand.vmem [shape: f32[25,16], index: 5, kind: input, shape index: {}]
  %s6 = inlined_call_operand.vmem [shape: f32[1,16], index: 6, kind: input, shape index: {}]
  %s7 = inlined_call_operand.vmem [shape: f32[4], index: 7, kind: input, shape index: {}]
  %s8 = inlined_call_operand.hbm [shape: f32[2,8,8,16], index: 8, kind: output, shape index: {}]
  %s9 = sld [smem:[#allocation0]]
  $region73: #{tpu_custom_call.1} parent=0
    _
  %s11 = ssub.s32 1, %s9
  %s12 = scalar_select 0, %s11, %s9
  $region1: #{tpu_custom_call.1} parent=0
    #allocation3 [shape = 'u8[65536]{0}', space=vmem, size = 0x10000, scoped, tag = 'input window, operand 0']
    #allocation4 [shape = 's32[2]{0}', space=sflag, size = 0x8, scoped, tag = 'scoped memory for tpu_custom_call.1']
    #allocation5 [shape = 's32[2]{0}', space=sflag, size = 0x8, scoped, tag = 'scoped memory for tpu_custom_call.1']
    #allocation6 [shape = 's32[2]{0}', space=sflag, size = 0x8, scoped, tag = 'scoped memory for tpu_custom_call.1']
    #allocation7 [shape = 'u8[512]{0}', space=smem, size = 0x200, scoped, tag = 'input window, operand 7, single buffered']
    #allocation8 [shape = 'u8[65536]{0}', space=vmem, size = 0x10000, scoped, tag = 'output window, operand 0']
    %13 = vsyncpa [#allocation4], 0
    %s14 = scalar_lea.sflag [#allocation4], 1
    %15 = vsyncpa %s14, 0
    %16 = vsyncpa [#allocation6], 0
    %17 = vsyncpa [#allocation5], 0
    %s18 = scalar_lea.sflag [#allocation5], 1
    %19 = vsyncpa %s18, 0
    loop: start=0, step=1, limit=4
    $region2: #{tpu_custom_call.1} parent=1 // loop_pre_header
      _
    $region3: #{tpu_custom_call.1} parent=1 // loop_header
      %s21 = sphi 0, %s25
      %p22 = scmp.ge.s32.totalorder %s21, 4
      %s31 = sphi 0, %s33
      %s34 = sphi 0, %s31
      %s35 = sphi 0, %s34
      %s51 = sphi 0, %s35
      %s55 = sphi 0, %s55
      %s57 = sphi 0, %s55
      %s58 = sphi 0, %s57
      %s72 = sphi 0, %s58
      %s76 = sphi 0, %s76
      %s78 = sphi 0, %s76
      %s79 = sphi 0, %s78
      %s93 = sphi 0, %s79
      %s97 = sphi 0, %s97
      %s99 = sphi 0, %s97
      %s100 = sphi 0, %s99
      %s114 = sphi 0, %s100
      %s118 = sphi 0, %s118
      %s120 = sphi 0, %s118
      %s121 = sphi 0, %s120
      %s135 = sphi 0, %s121
      %s139 = sphi 0, %s139
      %s141 = sphi 0, %s139
      %s142 = sphi 0, %s141
      %s156 = sphi 0, %s142
      %s160 = sphi 0, %s160
      %s162 = sphi 0, %s160
      %s163 = sphi 0, %s162
      %s177 = sphi 0, %s163
      %s181 = sphi 0, %s181
      %s183 = sphi 0, %s181
      %s184 = sphi 0, %s183
      %s198 = sphi 0, %s184
      %s204 = sphi 0, %s206
      %s207 = sphi 0, %s204
      %s208 = sphi 0, %s207
      %s224 = sphi 0, %s208
    $region4: #{tpu_custom_call.1} parent=1 // loop_header_branch
      %24 = sbr.rel (%p22) target = $region8
    $region5: #{tpu_custom_call.1} parent=1 // loop_body
      %s26 = ssub.s32 %s21, 1
      %s27 = ssub.s32 %s21, 2
      %s28 = sadd.s32 %s21, 1
      %s29 = ssub.s32 %s21, %s28
      %p30 = scmp.eq.s32.totalorder %s29, 0
      %s32 = sadd.s32 %s31, 1
      %s33 = scalar_select %p30, %s31, %s32
      %p36 = pneg %p30
      %p37 = scmp.eq.s32.totalorder %s21, 1
      %p38 = por %p36, %p37
      %p39 = scmp.ne.s32.totalorder %s31, %s34
      %p40 = scmp.eq.s32.totalorder %s21, 0
      %p41 = por %p39, %p40
      %p42 = scmp.ne.s32.totalorder %s31, %s34
      %p43 = scmp.eq.s32.totalorder %s26, 1
      %p44 = por %p42, %p43
      %p45 = scmp.ne.s32.totalorder %s34, %s35
      %p46 = scmp.eq.s32.totalorder %s26, 0
      %p47 = por %p45, %p46
      %p48 = scmp.ne.s32.totalorder %s34, %s35
      %p49 = scmp.eq.s32.totalorder %s27, 1
      %p50 = por %p48, %p49
      %p52 = scmp.ne.s32.totalorder %s35, %s51
      %p53 = scmp.eq.s32.totalorder %s27, 0
      %p54 = por %p52, %p53
      %s56 = sadd.s32 %s55, 1
      %p59 = scmp.eq.s32.totalorder %s21, 1
      %p60 = scmp.ne.s32.totalorder %s55, %s57
      %p61 = scmp.eq.s32.totalorder %s21, 0
      %p62 = por %p60, %p61
      %p63 = scmp.ne.s32.totalorder %s55, %s57
      %p64 = scmp.eq.s32.totalorder %s26, 1
      %p65 = por %p63, %p64
      %p66 = scmp.ne.s32.totalorder %s57, %s58
      %p67 = scmp.eq.s32.totalorder %s26, 0
      %p68 = por %p66, %p67
      %p69 = scmp.ne.s32.totalorder %s57, %s58
      %p70 = scmp.eq.s32.totalorder %s27, 1
      %p71 = por %p69, %p70
      %p73 = scmp.ne.s32.totalorder %s58, %s72
      %p74 = scmp.eq.s32.totalorder %s27, 0
      %p75 = por %p73, %p74
      %s77 = sadd.s32 %s76, 1
      %p80 = scmp.eq.s32.totalorder %s21, 1
      %p81 = scmp.ne.s32.totalorder %s76, %s78
      %p82 = scmp.eq.s32.totalorder %s21, 0
      %p83 = por %p81, %p82
      %p84 = scmp.ne.s32.totalorder %s76, %s78
      %p85 = scmp.eq.s32.totalorder %s26, 1
      %p86 = por %p84, %p85
      %p87 = scmp.ne.s32.totalorder %s78, %s79
      %p88 = scmp.eq.s32.totalorder %s26, 0
      %p89 = por %p87, %p88
      %p90 = scmp.ne.s32.totalorder %s78, %s79
      %p91 = scmp.eq.s32.totalorder %s27, 1
      %p92 = por %p90, %p91
      %p94 = scmp.ne.s32.totalorder %s79, %s93
      %p95 = scmp.eq.s32.totalorder %s27, 0
      %p96 = por %p94, %p95
      %s98 = sadd.s32 %s97, 1
      %p101 = scmp.eq.s32.totalorder %s21, 1
      %p102 = scmp.ne.s32.totalorder %s97, %s99
      %p103 = scmp.eq.s32.totalorder %s21, 0
      %p104 = por %p102, %p103
      %p105 = scmp.ne.s32.totalorder %s97, %s99
      %p106 = scmp.eq.s32.totalorder %s26, 1
      %p107 = por %p105, %p106
      %p108 = scmp.ne.s32.totalorder %s99, %s100
      %p109 = scmp.eq.s32.totalorder %s26, 0
      %p110 = por %p108, %p109
      %p111 = scmp.ne.s32.totalorder %s99, %s100
      %p112 = scmp.eq.s32.totalorder %s27, 1
      %p113 = por %p111, %p112
      %p115 = scmp.ne.s32.totalorder %s100, %s114
      %p116 = scmp.eq.s32.totalorder %s27, 0
      %p117 = por %p115, %p116
      %s119 = sadd.s32 %s118, 1
      %p122 = scmp.eq.s32.totalorder %s21, 1
      %p123 = scmp.ne.s32.totalorder %s118, %s120
      %p124 = scmp.eq.s32.totalorder %s21, 0
      %p125 = por %p123, %p124
      %p126 = scmp.ne.s32.totalorder %s118, %s120
      %p127 = scmp.eq.s32.totalorder %s26, 1
      %p128 = por %p126, %p127
      %p129 = scmp.ne.s32.totalorder %s120, %s121
      %p130 = scmp.eq.s32.totalorder %s26, 0
      %p131 = por %p129, %p130
      %p132 = scmp.ne.s32.totalorder %s120, %s121
      %p133 = scmp.eq.s32.totalorder %s27, 1
      %p134 = por %p132, %p133
      %p136 = scmp.ne.s32.totalorder %s121, %s135
      %p137 = scmp.eq.s32.totalorder %s27, 0
      %p138 = por %p136, %p137
      %s140 = sadd.s32 %s139, 1
      %p143 = scmp.eq.s32.totalorder %s21, 1
      %p144 = scmp.ne.s32.totalorder %s139, %s141
      %p145 = scmp.eq.s32.totalorder %s21, 0
      %p146 = por %p144, %p145
      %p147 = scmp.ne.s32.totalorder %s139, %s141
      %p148 = scmp.eq.s32.totalorder %s26, 1
      %p149 = por %p147, %p148
      %p150 = scmp.ne.s32.totalorder %s141, %s142
      %p151 = scmp.eq.s32.totalorder %s26, 0
      %p152 = por %p150, %p151
      %p153 = scmp.ne.s32.totalorder %s141, %s142
      %p154 = scmp.eq.s32.totalorder %s27, 1
      %p155 = por %p153, %p154
      %p157 = scmp.ne.s32.totalorder %s142, %s156
      %p158 = scmp.eq.s32.totalorder %s27, 0
      %p159 = por %p157, %p158
      %s161 = sadd.s32 %s160, 1
      %p164 = scmp.eq.s32.totalorder %s21, 1
      %p165 = scmp.ne.s32.totalorder %s160, %s162
      %p166 = scmp.eq.s32.totalorder %s21, 0
      %p167 = por %p165, %p166
      %p168 = scmp.ne.s32.totalorder %s160, %s162
      %p169 = scmp.eq.s32.totalorder %s26, 1
      %p170 = por %p168, %p169
      %p171 = scmp.ne.s32.totalorder %s162, %s163
      %p172 = scmp.eq.s32.totalorder %s26, 0
      %p173 = por %p171, %p172
      %p174 = scmp.ne.s32.totalorder %s162, %s163
      %p175 = scmp.eq.s32.totalorder %s27, 1
      %p176 = por %p174, %p175
      %p178 = scmp.ne.s32.totalorder %s163, %s177
      %p179 = scmp.eq.s32.totalorder %s27, 0
      %p180 = por %p178, %p179
      %s182 = sadd.s32 %s181, 1
      %p185 = scmp.eq.s32.totalorder %s21, 1
      %p186 = scmp.ne.s32.totalorder %s181, %s183
      %p187 = scmp.eq.s32.totalorder %s21, 0
      %p188 = por %p186, %p187
      %p189 = scmp.ne.s32.totalorder %s181, %s183
      %p190 = scmp.eq.s32.totalorder %s26, 1
      %p191 = por %p189, %p190
      %p192 = scmp.ne.s32.totalorder %s183, %s184
      %p193 = scmp.eq.s32.totalorder %s26, 0
      %p194 = por %p192, %p193
      %p195 = scmp.ne.s32.totalorder %s183, %s184
      %p196 = scmp.eq.s32.totalorder %s27, 1
      %p197 = por %p195, %p196
      %p199 = scmp.ne.s32.totalorder %s184, %s198
      %p200 = scmp.eq.s32.totalorder %s27, 0
      %p201 = por %p199, %p200
      %s202 = ssub.s32 %s21, %s28
      %p203 = scmp.eq.s32.totalorder %s202, 0
      %s205 = sadd.s32 %s204, 1
      %s206 = scalar_select %p203, %s204, %s205
      %p209 = pneg %p203
      %p210 = scmp.eq.s32.totalorder %s21, 1
      %p211 = por %p209, %p210
      %p212 = scmp.ne.s32.totalorder %s204, %s207
      %p213 = scmp.eq.s32.totalorder %s21, 0
      %p214 = por %p212, %p213
      %p215 = scmp.ne.s32.totalorder %s204, %s207
      %p216 = scmp.eq.s32.totalorder %s26, 1
      %p217 = por %p215, %p216
      %p218 = scmp.ne.s32.totalorder %s207, %s208
      %p219 = scmp.eq.s32.totalorder %s26, 0
      %p220 = por %p218, %p219
      %p221 = scmp.ne.s32.totalorder %s207, %s208
      %p222 = scmp.eq.s32.totalorder %s27, 1
      %p223 = por %p221, %p222
      %p225 = scmp.ne.s32.totalorder %s208, %s224
      %p226 = scmp.eq.s32.totalorder %s27, 0
      %p227 = por %p225, %p226
      %p228 = scmp.le.s32.totalorder 1, %s21
      %p229 = scmp.lt.s32.totalorder %s21, 3
      %p230 = pnand %p228, %p229
      %p231 = pneg %p230
      // Predicated region
      $region9: #{tpu_custom_call.1} parent=5 // pred_check
        _
      $region10: #{tpu_custom_call.1} parent=5 // pred_check_branch
        %233 = sbr.rel (%p230) target = $region12
      $region11: #{tpu_custom_call.1} parent=5 // pred_region
        %s234 = ssub.s32 %s21, 1
        // Predicated region
        $region13: #{tpu_custom_call.1} parent=11 // pred_check
          %p235 = pneg %p68
        $region14: #{tpu_custom_call.1} parent=11 // pred_check_branch
          %237 = sbr.rel (%p235) target = $region16
        $region15: #{tpu_custom_call.1} parent=11 // pred_region
          _
        $region16: #{tpu_custom_call.1} parent=11 // pred_fallthru
          _
        // Predicated region
        $region17: #{tpu_custom_call.1} parent=11 // pred_check
          %p238 = pneg %p89
        $region18: #{tpu_custom_call.1} parent=11 // pred_check_branch
          %240 = sbr.rel (%p238) target = $region20
        $region19: #{tpu_custom_call.1} parent=11 // pred_region
          _
        $region20: #{tpu_custom_call.1} parent=11 // pred_fallthru
          _
        // Predicated region
        $region21: #{tpu_custom_call.1} parent=11 // pred_check
          %p241 = pneg %p110
        $region22: #{tpu_custom_call.1} parent=11 // pred_check_branch
          %243 = sbr.rel (%p241) target = $region24
        $region23: #{tpu_custom_call.1} parent=11 // pred_region
          _
        $region24: #{tpu_custom_call.1} parent=11 // pred_fallthru
          _
        // Predicated region
        $region25: #{tpu_custom_call.1} parent=11 // pred_check
          %p244 = pneg %p131
        $region26: #{tpu_custom_call.1} parent=11 // pred_check_branch
          %246 = sbr.rel (%p244) target = $region28
        $region27: #{tpu_custom_call.1} parent=11 // pred_region
          _
        $region28: #{tpu_custom_call.1} parent=11 // pred_fallthru
          _
        // Predicated region
        $region29: #{tpu_custom_call.1} parent=11 // pred_check
          %p247 = pneg %p152
        $region30: #{tpu_custom_call.1} parent=11 // pred_check_branch
          %249 = sbr.rel (%p247) target = $region32
        $region31: #{tpu_custom_call.1} parent=11 // pred_region
          _
        $region32: #{tpu_custom_call.1} parent=11 // pred_fallthru
          _
        // Predicated region
        $region33: #{tpu_custom_call.1} parent=11 // pred_check
          %p250 = pneg %p173
        $region34: #{tpu_custom_call.1} parent=11 // pred_check_branch
          %252 = sbr.rel (%p250) target = $region36
        $region35: #{tpu_custom_call.1} parent=11 // pred_region
          _
        $region36: #{tpu_custom_call.1} parent=11 // pred_fallthru
          _
        // Predicated region
        $region37: #{tpu_custom_call.1} parent=11 // pred_check
          %p253 = pneg %p194
        $region38: #{tpu_custom_call.1} parent=11 // pred_check_branch
          %255 = sbr.rel (%p253) target = $region40
        $region39: #{tpu_custom_call.1} parent=11 // pred_region
          %s257 = ssub.s32 16, 16
          %258 = vsyncadd [#allocation6], %s257
          %s260 = sshll.u32 %s7, 4
          %s261 = int_to_ptr.vmem [resolvable:$true] %s260
          %263 = dma.vmem_to_smem %s261, 16, [#allocation7], [#allocation6]
        $region40: #{tpu_custom_call.1} parent=11 // pred_fallthru
          _
      $region12: #{tpu_custom_call.1} parent=5 // pred_fallthru
        _
      %p264 = scmp.lt.s32.totalorder %s21, 2
      // Predicated region
      $region41: #{tpu_custom_call.1} parent=5 // pred_check
        %p265 = pneg %p264
      $region42: #{tpu_custom_call.1} parent=5 // pred_check_branch
        %267 = sbr.rel (%p265) target = $region44
      $region43: #{tpu_custom_call.1} parent=5 // pred_region
        // Predicated region
        $region45: #{tpu_custom_call.1} parent=43 // pred_check
          %p268 = pneg %p41
        $region46: #{tpu_custom_call.1} parent=43 // pred_check_branch
          %270 = sbr.rel (%p268) target = $region48
        $region47: #{tpu_custom_call.1} parent=43 // pred_region
          %s271 = sand.u32 %s31, 1
          %s272 = scalar_lea.sflag [#allocation4], %s271
          %s273 = sand.u32 %s31, 1
          %s274 = smul.addr %s273, 64
          %s275 = scalar_lea.vmem [#allocation3], %s274
          %s277 = ssub.s32 1024, 1024
          %278 = vsyncadd %s272, %s277
          %s279 = smul.addr %s21, 8
          %s280 = smul.addr %s279, 128
          %s281 = scalar_lea.hbm %s0, %s280
          %s282 = sshll.u32 %s275, 4
          %s283 = int_to_ptr.vmem [resolvable:$true] %s282
          %288 = dma.hbm_to_vmem [thread:$0]  %s281, 1024, %s283, %s272, 128, 128, 8
        $region48: #{tpu_custom_call.1} parent=43 // pred_fallthru
          _
      $region44: #{tpu_custom_call.1} parent=5 // pred_fallthru
        _
      %p289 = scmp.le.s32.totalorder 1, %s21
      %p290 = scmp.lt.s32.totalorder %s21, 3
      %p291 = pnand %p289, %p290
      %p292 = pneg %p291
      // Predicated region
      $region49: #{tpu_custom_call.1} parent=5 // pred_check
        _
      $region50: #{tpu_custom_call.1} parent=5 // pred_check_branch
        %294 = sbr.rel (%p291) target = $region52
      $region51: #{tpu_custom_call.1} parent=5 // pred_region
        %s295 = ssub.s32 %s21, 1
        %s296 = sand.u32 %s34, 1
        %s297 = scalar_lea.sflag [#allocation4], %s296
        %s298 = sand.u32 %s34, 1
        %s299 = smul.addr %s298, 64
        %s300 = scalar_lea.vmem [#allocation3], %s299
        // Predicated region
        $region53: #{tpu_custom_call.1} parent=51 // pred_check
          %p301 = pneg %p47
        $region54: #{tpu_custom_call.1} parent=51 // pred_check_branch
          %303 = sbr.rel (%p301) target = $region56
        $region55: #{tpu_custom_call.1} parent=51 // pred_region
          %304 = dma.done %s297, 1024
        $region56: #{tpu_custom_call.1} parent=51 // pred_fallthru
          _
        // Predicated region
        $region57: #{tpu_custom_call.1} parent=51 // pred_check
          %p305 = pneg %p194
        $region58: #{tpu_custom_call.1} parent=51 // pred_check_branch
          %307 = sbr.rel (%p305) target = $region60
        $region59: #{tpu_custom_call.1} parent=51 // pred_region
          %308 = dma.done [#allocation6], 16
        $region60: #{tpu_custom_call.1} parent=51 // pred_fallthru
          _
        %309 = sfence
        %s310 = sand.u32 %s34, 1
        %s311 = scalar_lea.sflag [#allocation4], %s310
        %s312 = sand.u32 %s34, 1
        %s313 = smul.addr %s312, 64
        %s314 = scalar_lea.vmem [#allocation3], %s313
        %p315 = pneg %p47
        %p316 = pneg %p44
        %p317 = pneg %p68
        %p318 = pneg %p65
        %p319 = pneg %p89
        %p320 = pneg %p86
        %p321 = pneg %p110
        %p322 = pneg %p107
        %p323 = pneg %p131
        %p324 = pneg %p128
        %p325 = pneg %p152
        %p326 = pneg %p149
        %p327 = pneg %p173
        %p328 = pneg %p170
        %p329 = pneg %p194
        %p330 = pneg %p191
        %p331 = pneg %p220
        %p332 = pneg %p217
        %s333 = sand.u32 %s207, 1
        %s334 = scalar_lea.sflag [#allocation5], %s333
        %s335 = sand.u32 %s207, 1
        %s336 = smul.addr %s335, 64
        %s337 = scalar_lea.vmem [#allocation8], %s336
        %v338 = vld [vmem:[%s300] sm:$0xff]
        %v339 = vld [vmem:[%s300 + $0x8] sm:$0xff]
        %v340 = vld [vmem:[%s300 + $0x10] sm:$0xff]
        %v341 = vld [vmem:[%s300 + $0x18] sm:$0xff]
        %v342 = vld [vmem:[%s300 + $0x20] sm:$0xff]
        %v343 = vld [vmem:[%s300 + $0x28] sm:$0xff]
        %v344 = vld [vmem:[%s300 + $0x30] sm:$0xff]
        %v345 = vld [vmem:[%s300 + $0x38] sm:$0xff]
        %v346 = vld [vmem:[%s1] sm:$0xff]
        %v347 = vld [vmem:[%s1 + $0x8] sm:$0xff]
        %v348 = vld [vmem:[%s2] sm:$0x1]
        %v350 = vlaneseq
        %v351 = vshrl.u32 %v350, 7
        %v352 = vsub.s32 0, %v351
        %v353 = vrot.slane %v348, %v352
        %vm355 = vcmask 130048
        %v357 = vsel %vm355, %v338, 0
        %v360 = vsel %vm355, %v339, 0
        %v363 = vsel %vm355, %v340, 0
        %v366 = vsel %vm355, %v341, 0
        %v369 = vsel %vm355, %v342, 0
        %v372 = vsel %vm355, %v343, 0
        %v375 = vsel %vm355, %v344, 0
        %v378 = vsel %vm355, %v345, 0
        %380 = vmatprep.subr.mxu0 0.0
        %381 = vmatpush1.msra.mxu0 %v346
        %382 = vmatprep.subr.mxu0 0.0
        %383 = vmatpush1.msra.mxu0 %v347
        %384 = vmatprep.subr.mxu0 0.0
        %385 = vmatpush1.msra.mxu0 0.0
        %386 = vmatprep.subr.mxu0 0.0
        %387 = vmatpush1.msra.mxu0 0.0
        %388 = vmatprep.subr.mxu0 0.0
        %389 = vmatpush1.msra.mxu0 0.0
        %390 = vmatprep.subr.mxu0 0.0
        %391 = vmatpush1.msra.mxu0 0.0
        %392 = vmatprep.subr.mxu0 0.0
        %393 = vmatpush1.msra.mxu0 0.0
        %394 = vmatprep.subr.mxu0 0.0
        %395 = vmatpush1.msra.mxu0 0.0
        %396 = vmatprep.subr.mxu0 0.0
        %397 = vmatpush1.msra.mxu0 0.0
        %398 = vmatprep.subr.mxu0 0.0
        %399 = vmatpush1.msra.mxu0 0.0
        %400 = vmatprep.subr.mxu0 0.0
        %401 = vmatpush1.msra.mxu0 0.0
        %402 = vmatprep.subr.mxu0 0.0
        %403 = vmatpush1.msra.mxu0 0.0
        %404 = vmatprep.subr.mxu0 0.0
        %405 = vmatpush1.msra.mxu0 0.0
        %406 = vmatprep.subr.mxu0 0.0
        %407 = vmatpush1.msra.mxu0 0.0
        %408 = vmatprep.subr.mxu0 0.0
        %409 = vmatpush1.msra.mxu0 0.0
        %410 = vmatprep.subr.mxu0 0.0
        %411 = vmatpush1.msra.mxu0 0.0
        %412 = vmatprep.subr.mxu0 0.0
        %413 = vmatpush1.msra.mxu0 0.0
        %414 = vmatprep.subr.mxu0 0.0
        %415 = vmatpush1.msra.mxu0 0.0
        %416 = vmatprep.subr.mxu0 0.0
        %417 = vmatpush1.msra.mxu0 0.0
        %418 = vmatprep.subr.mxu0 0.0
        %419 = vmatpush1.msra.mxu0 0.0
        %420 = vmatprep.subr.mxu0 0.0
        %421 = vmatpush1.msra.mxu0 0.0
        %422 = vmatprep.subr.mxu0 0.0
        %423 = vmatpush1.msra.mxu0 0.0
        %424 = vmatprep.subr.mxu0 0.0
        %425 = vmatpush1.msra.mxu0 0.0
        %426 = vmatprep.subr.mxu0 0.0
        %427 = vmatpush1.msra.mxu0 0.0
        %428 = vmatprep.subr.mxu0 0.0
        %429 = vmatpush1.msra.mxu0 0.0
        %430 = vmatprep.subr.mxu0 0.0
        %431 = vmatpush1.msra.mxu0 0.0
        %432 = vmatprep.subr.mxu0 0.0
        %433 = vmatpush1.msra.mxu0 0.0
        %434 = vmatprep.subr.mxu0 0.0
        %435 = vmatpush1.msra.mxu0 0.0
        %436 = vmatprep.subr.mxu0 0.0
        %437 = vmatpush1.msra.mxu0 0.0
        %438 = vmatprep.subr.mxu0 0.0
        %439 = vmatpush1.msra.mxu0 0.0
        %440 = vmatprep.subr.mxu0 0.0
        %441 = vmatpush1.msra.mxu0 0.0
        %442 = vmatprep.subr.mxu0 0.0
        %443 = vmatpush1.msra.mxu0 0.0
        %444 = vmatprep.mubr.f32.mxu0 0.0
        %445 = vmatmul.mubr.f32.gmra.mrb[0].mxu0 %v357
        %v446 = vpop.f32.mrb[0].mxu0
        %v447 = vadd.f32 %v353, %v446
        %v448 = vpop.f32.mrb[0].mxu0
        %449 = vmatprep.mubr.f32.mxu0 0.0
        %450 = vmatmul.mubr.f32.gmra.mrb[0].mxu0 %v360
        %v451 = vpop.f32.mrb[0].mxu0
        %v452 = vadd.f32 %v353, %v451
        %v453 = vpop.f32.mrb[0].mxu0
        %454 = vmatprep.mubr.f32.mxu0 0.0
        %455 = vmatmul.mubr.f32.gmra.mrb[0].mxu0 %v363
        %v456 = vpop.f32.mrb[0].mxu0
        %v457 = vadd.f32 %v353, %v456
        %v458 = vpop.f32.mrb[0].mxu0
        %459 = vmatprep.mubr.f32.mxu0 0.0
        %460 = vmatmul.mubr.f32.gmra.mrb[0].mxu0 %v366
        %v461 = vpop.f32.mrb[0].mxu0
        %v462 = vadd.f32 %v353, %v461
        %v463 = vpop.f32.mrb[0].mxu0
        %464 = vmatprep.mubr.f32.mxu0 0.0
        %465 = vmatmul.mubr.f32.gmra.mrb[0].mxu0 %v369
        %v466 = vpop.f32.mrb[0].mxu0
        %v467 = vadd.f32 %v353, %v466
        %v468 = vpop.f32.mrb[0].mxu0
        %469 = vmatprep.mubr.f32.mxu0 0.0
        %470 = vmatmul.mubr.f32.gmra.mrb[0].mxu0 %v372
        %v471 = vpop.f32.mrb[0].mxu0
        %v472 = vadd.f32 %v353, %v471
        %v473 = vpop.f32.mrb[0].mxu0
        %474 = vmatprep.mubr.f32.mxu0 0.0
        %475 = vmatmul.mubr.f32.gmra.mrb[0].mxu0 %v375
        %v476 = vpop.f32.mrb[0].mxu0
        %v477 = vadd.f32 %v353, %v476
        %v478 = vpop.f32.mrb[0].mxu0
        %479 = vmatprep.mubr.f32.mxu0 0.0
        %480 = vmatmul.mubr.f32.gmra.mrb[0].mxu0 %v378
        %v481 = vpop.f32.mrb[0].mxu0
        %v482 = vadd.f32 %v353, %v481
        %v483 = vpop.f32.mrb[0].mxu0
        %484 = vdwg.mxu0
        %vm485 = vcmp.gt.f32.partialorder %v447, 0.0
        %vm486 = vcmp.gt.f32.partialorder %v452, 0.0
        %vm487 = vcmp.gt.f32.partialorder %v457, 0.0
        %vm488 = vcmp.gt.f32.partialorder %v462, 0.0
        %vm489 = vcmp.gt.f32.partialorder %v467, 0.0
        %vm490 = vcmp.gt.f32.partialorder %v472, 0.0
        %vm491 = vcmp.gt.f32.partialorder %v477, 0.0
        %vm492 = vcmp.gt.f32.partialorder %v482, 0.0
        %v493 = vmul.f32 %v447, 0.01
        %v494 = vmul.f32 %v452, 0.01
        %v495 = vmul.f32 %v457, 0.01
        %v496 = vmul.f32 %v462, 0.01
        %v497 = vmul.f32 %v467, 0.01
        %v498 = vmul.f32 %v472, 0.01
        %v499 = vmul.f32 %v477, 0.01
        %v500 = vmul.f32 %v482, 0.01
        %v501 = vsel %vm485, %v447, %v493
        %v502 = vsel %vm486, %v452, %v494
        %v503 = vsel %vm487, %v457, %v495
        %v504 = vsel %vm488, %v462, %v496
        %v505 = vsel %vm489, %v467, %v497
        %v506 = vsel %vm490, %v472, %v498
        %v507 = vsel %vm491, %v477, %v499
        %v508 = vsel %vm492, %v482, %v500
        %511 = vrot.lane.b32.xlu0 %v346, 112
        %v512 = vpop.permute.xlu0 %511
        %513 = vrot.lane.b32.xlu0 %v347, 112
        %v514 = vpop.permute.xlu0 %513
        %517 = vrot.lane.b32.xlu0 %v353, 112
        %v518 = vpop.permute.xlu0 %517
        %520 = vmatprep.subr.mxu0 0.0
        %521 = vmatpush1.msra.mxu0 %v512
        %522 = vmatprep.subr.mxu0 0.0
        %523 = vmatpush1.msra.mxu0 %v514
        %524 = vmatprep.subr.mxu0 0.0
        %525 = vmatpush1.msra.mxu0 0.0
        %526 = vmatprep.subr.mxu0 0.0
        %527 = vmatpush1.msra.mxu0 0.0
        %528 = vmatprep.subr.mxu0 0.0
        %529 = vmatpush1.msra.mxu0 0.0
        %530 = vmatprep.subr.mxu0 0.0
        %531 = vmatpush1.msra.mxu0 0.0
        %532 = vmatprep.subr.mxu0 0.0
        %533 = vmatpush1.msra.mxu0 0.0
        %534 = vmatprep.subr.mxu0 0.0
        %535 = vmatpush1.msra.mxu0 0.0
        %536 = vmatprep.subr.mxu0 0.0
        %537 = vmatpush1.msra.mxu0 0.0
        %538 = vmatprep.subr.mxu0 0.0
        %539 = vmatpush1.msra.mxu0 0.0
        %540 = vmatprep.subr.mxu0 0.0
        %541 = vmatpush1.msra.mxu0 0.0
        %542 = vmatprep.subr.mxu0 0.0
        %543 = vmatpush1.msra.mxu0 0.0
        %544 = vmatprep.subr.mxu0 0.0
        %545 = vmatpush1.msra.mxu0 0.0
        %546 = vmatprep.subr.mxu0 0.0
        %547 = vmatpush1.msra.mxu0 0.0
        %548 = vmatprep.subr.mxu0 0.0
        %549 = vmatpush1.msra.mxu0 0.0
        %550 = vmatprep.subr.mxu0 0.0
        %551 = vmatpush1.msra.mxu0 0.0
        %552 = vmatprep.subr.mxu0 0.0
        %553 = vmatpush1.msra.mxu0 0.0
        %554 = vmatprep.subr.mxu0 0.0
        %555 = vmatpush1.msra.mxu0 0.0
        %556 = vmatprep.subr.mxu0 0.0
        %557 = vmatpush1.msra.mxu0 0.0
        %558 = vmatprep.subr.mxu0 0.0
        %559 = vmatpush1.msra.mxu0 0.0
        %560 = vmatprep.subr.mxu0 0.0
        %561 = vmatpush1.msra.mxu0 0.0
        %562 = vmatprep.subr.mxu0 0.0
        %563 = vmatpush1.msra.mxu0 0.0
        %564 = vmatprep.subr.mxu0 0.0
        %565 = vmatpush1.msra.mxu0 0.0
        %566 = vmatprep.subr.mxu0 0.0
        %567 = vmatpush1.msra.mxu0 0.0
        %568 = vmatprep.subr.mxu0 0.0
        %569 = vmatpush1.msra.mxu0 0.0
        %570 = vmatprep.subr.mxu0 0.0
        %571 = vmatpush1.msra.mxu0 0.0
        %572 = vmatprep.subr.mxu0 0.0
        %573 = vmatpush1.msra.mxu0 0.0
        %574 = vmatprep.subr.mxu0 0.0
        %575 = vmatpush1.msra.mxu0 0.0
        %576 = vmatprep.subr.mxu0 0.0
        %577 = vmatpush1.msra.mxu0 0.0
        %578 = vmatprep.subr.mxu0 0.0
        %579 = vmatpush1.msra.mxu0 0.0
        %580 = vmatprep.subr.mxu0 0.0
        %581 = vmatpush1.msra.mxu0 0.0
        %582 = vmatprep.subr.mxu0 0.0
        %583 = vmatpush1.msra.mxu0 0.0
        %584 = vmatprep.mubr.f32.mxu0 0.0
        %585 = vmatmul.mubr.f32.gmra.mrb[0].mxu0 %v357
        %v586 = vpop.f32.mrb[0].mxu0
        %v587 = vadd.f32 %v518, %v586
        %v588 = vpop.f32.mrb[0].mxu0
        %589 = vmatprep.mubr.f32.mxu0 0.0
        %590 = vmatmul.mubr.f32.gmra.mrb[0].mxu0 %v360
        %v591 = vpop.f32.mrb[0].mxu0
        %v592 = vadd.f32 %v518, %v591
        %v593 = vpop.f32.mrb[0].mxu0
        %594 = vmatprep.mubr.f32.mxu0 0.0
        %595 = vmatmul.mubr.f32.gmra.mrb[0].mxu0 %v363
        %v596 = vpop.f32.mrb[0].mxu0
        %v597 = vadd.f32 %v518, %v596
        %v598 = vpop.f32.mrb[0].mxu0
        %599 = vmatprep.mubr.f32.mxu0 0.0
        %600 = vmatmul.mubr.f32.gmra.mrb[0].mxu0 %v366
        %v601 = vpop.f32.mrb[0].mxu0
        %v602 = vadd.f32 %v518, %v601
        %v603 = vpop.f32.mrb[0].mxu0
        %604 = vmatprep.mubr.f32.mxu0 0.0
        %605 = vmatmul.mubr.f32.gmra.mrb[0].mxu0 %v369
        %v606 = vpop.f32.mrb[0].mxu0
        %v607 = vadd.f32 %v518, %v606
        %v608 = vpop.f32.mrb[0].mxu0
        %609 = vmatprep.mubr.f32.mxu0 0.0
        %610 = vmatmul.mubr.f32.gmra.mrb[0].mxu0 %v372
        %v611 = vpop.f32.mrb[0].mxu0
        %v612 = vadd.f32 %v518, %v611
        %v613 = vpop.f32.mrb[0].mxu0
        %614 = vmatprep.mubr.f32.mxu0 0.0
        %615 = vmatmul.mubr.f32.gmra.mrb[0].mxu0 %v375
        %v616 = vpop.f32.mrb[0].mxu0
        %v617 = vadd.f32 %v518, %v616
        %v618 = vpop.f32.mrb[0].mxu0
        %619 = vmatprep.mubr.f32.mxu0 0.0
        %620 = vmatmul.mubr.f32.gmra.mrb[0].mxu0 %v378
        %v621 = vpop.f32.mrb[0].mxu0
        %v622 = vadd.f32 %v518, %v621
        %v623 = vpop.f32.mrb[0].mxu0
        %624 = vdwg.mxu0
        %625 = vrot.lane.b32.xlu0 %v346, 96
        %v626 = vpop.permute.xlu0 %625
        %627 = vrot.lane.b32.xlu0 %v347, 96
        %v628 = vpop.permute.xlu0 %627
        %631 = vrot.lane.b32.xlu0 %v353, 96
        %v632 = vpop.permute.xlu0 %631
        %634 = vmatprep.subr.mxu0 0.0
        %635 = vmatpush1.msra.mxu0 %v626
        %636 = vmatprep.subr.mxu0 0.0
        %637 = vmatpush1.msra.mxu0 %v628
        %638 = vmatprep.subr.mxu0 0.0
        %639 = vmatpush1.msra.mxu0 0.0
        %640 = vmatprep.subr.mxu0 0.0
        %641 = vmatpush1.msra.mxu0 0.0
        %642 = vmatprep.subr.mxu0 0.0
        %643 = vmatpush1.msra.mxu0 0.0
        %644 = vmatprep.subr.mxu0 0.0
        %645 = vmatpush1.msra.mxu0 0.0
        %646 = vmatprep.subr.mxu0 0.0
        %647 = vmatpush1.msra.mxu0 0.0
        %648 = vmatprep.subr.mxu0 0.0
        %649 = vmatpush1.msra.mxu0 0.0
        %650 = vmatprep.subr.mxu0 0.0
        %651 = vmatpush1.msra.mxu0 0.0
        %652 = vmatprep.subr.mxu0 0.0
        %653 = vmatpush1.msra.mxu0 0.0
        %654 = vmatprep.subr.mxu0 0.0
        %655 = vmatpush1.msra.mxu0 0.0
        %656 = vmatprep.subr.mxu0 0.0
        %657 = vmatpush1.msra.mxu0 0.0
        %658 = vmatprep.subr.mxu0 0.0
        %659 = vmatpush1.msra.mxu0 0.0
        %660 = vmatprep.subr.mxu0 0.0
        %661 = vmatpush1.msra.mxu0 0.0
        %662 = vmatprep.subr.mxu0 0.0
        %663 = vmatpush1.msra.mxu0 0.0
        %664 = vmatprep.subr.mxu0 0.0
        %665 = vmatpush1.msra.mxu0 0.0
        %666 = vmatprep.subr.mxu0 0.0
        %667 = vmatpush1.msra.mxu0 0.0
        %668 = vmatprep.subr.mxu0 0.0
        %669 = vmatpush1.msra.mxu0 0.0
        %670 = vmatprep.subr.mxu0 0.0
        %671 = vmatpush1.msra.mxu0 0.0
        %672 = vmatprep.subr.mxu0 0.0
        %673 = vmatpush1.msra.mxu0 0.0
        %674 = vmatprep.subr.mxu0 0.0
        %675 = vmatpush1.msra.mxu0 0.0
        %676 = vmatprep.subr.mxu0 0.0
        %677 = vmatpush1.msra.mxu0 0.0
        %678 = vmatprep.subr.mxu0 0.0
        %679 = vmatpush1.msra.mxu0 0.0
        %680 = vmatprep.subr.mxu0 0.0
        %681 = vmatpush1.msra.mxu0 0.0
        %682 = vmatprep.subr.mxu0 0.0
        %683 = vmatpush1.msra.mxu0 0.0
        %684 = vmatprep.subr.mxu0 0.0
        %685 = vmatpush1.msra.mxu0 0.0
        %686 = vmatprep.subr.mxu0 0.0
        %687 = vmatpush1.msra.mxu0 0.0
        %688 = vmatprep.subr.mxu0 0.0
        %689 = vmatpush1.msra.mxu0 0.0
        %690 = vmatprep.subr.mxu0 0.0
        %691 = vmatpush1.msra.mxu0 0.0
        %692 = vmatprep.subr.mxu0 0.0
        %693 = vmatpush1.msra.mxu0 0.0
        %694 = vmatprep.subr.mxu0 0.0
        %695 = vmatpush1.msra.mxu0 0.0
        %696 = vmatprep.subr.mxu0 0.0
        %697 = vmatpush1.msra.mxu0 0.0
        %698 = vmatprep.mubr.f32.mxu0 0.0
        %699 = vmatmul.mubr.f32.gmra.mrb[0].mxu0 %v357
        %v700 = vpop.f32.mrb[0].mxu0
        %v701 = vadd.f32 %v632, %v700
        %v702 = vpop.f32.mrb[0].mxu0
        %703 = vmatprep.mubr.f32.mxu0 0.0
        %704 = vmatmul.mubr.f32.gmra.mrb[0].mxu0 %v360
        %v705 = vpop.f32.mrb[0].mxu0
        %v706 = vadd.f32 %v632, %v705
        %v707 = vpop.f32.mrb[0].mxu0
        %708 = vmatprep.mubr.f32.mxu0 0.0
        %709 = vmatmul.mubr.f32.gmra.mrb[0].mxu0 %v363
        %v710 = vpop.f32.mrb[0].mxu0
        %v711 = vadd.f32 %v632, %v710
        %v712 = vpop.f32.mrb[0].mxu0
        %713 = vmatprep.mubr.f32.mxu0 0.0
        %714 = vmatmul.mubr.f32.gmra.mrb[0].mxu0 %v366
        %v715 = vpop.f32.mrb[0].mxu0
        %v716 = vadd.f32 %v632, %v715
        %v717 = vpop.f32.mrb[0].mxu0
        %718 = vmatprep.mubr.f32.mxu0 0.0
        %719 = vmatmul.mubr.f32.gmra.mrb[0].mxu0 %v369
        %v720 = vpop.f32.mrb[0].mxu0
        %v721 = vadd.f32 %v632, %v720
        %v722 = vpop.f32.mrb[0].mxu0
        %723 = vmatprep.mubr.f32.mxu0 0.0
        %724 = vmatmul.mubr.f32.gmra.mrb[0].mxu0 %v372
        %v725 = vpop.f32.mrb[0].mxu0
        %v726 = vadd.f32 %v632, %v725
        %v727 = vpop.f32.mrb[0].mxu0
        %728 = vmatprep.mubr.f32.mxu0 0.0
        %729 = vmatmul.mubr.f32.gmra.mrb[0].mxu0 %v375
        %v730 = vpop.f32.mrb[0].mxu0
        %v731 = vadd.f32 %v632, %v730
        %v732 = vpop.f32.mrb[0].mxu0
        %733 = vmatprep.mubr.f32.mxu0 0.0
        %734 = vmatmul.mubr.f32.gmra.mrb[0].mxu0 %v378
        %v735 = vpop.f32.mrb[0].mxu0
        %v736 = vadd.f32 %v632, %v735
        %v737 = vpop.f32.mrb[0].mxu0
        %738 = vdwg.mxu0
        %v739 = vlaneseq
        %v740 = vshrl.u32 %v739, 7
        %v741 = vld [vmem:[%s3] sm:$0xff]
        %v742 = vld [vmem:[%s3 + $0x8] sm:$0x1]
        %v743 = vld [vmem:[%s4] sm:$0x1]
        %v744 = vrot.slane %v587, 7
        %v745 = vrot.slane %v592, 7
        %v746 = vrot.slane %v597, 7
        %v747 = vrot.slane %v602, 7
        %v748 = vrot.slane %v607, 7
        %v749 = vrot.slane %v612, 7
        %v750 = vrot.slane %v617, 7
        %v751 = vrot.slane %v622, 7
        %vm752 = vcmp.ge.s32.totalorder %v740, 1
        %v753 = vsel %vm752, 1, 0
        %vm754 = vcmp.eq.s32.totalorder %v753, 1
        %v755 = vsel %vm754, %v744, 0.0
        %v756 = vsel %vm754, %v745, 0.0
        %v757 = vsel %vm754, %v746, 0.0
        %v758 = vsel %vm754, %v747, 0.0
        %v759 = vsel %vm754, %v748, 0.0
        %v760 = vsel %vm754, %v749, 0.0
        %v761 = vsel %vm754, %v750, 0.0
        %v762 = vsel %vm754, %v751, 0.0
        %v763 = vrot.slane %v587, 1
        %v764 = vrot.slane %v592, 1
        %v765 = vrot.slane %v597, 1
        %v766 = vrot.slane %v602, 1
        %v767 = vrot.slane %v607, 1
        %v768 = vrot.slane %v612, 1
        %v769 = vrot.slane %v617, 1
        %v770 = vrot.slane %v622, 1
        %vm771 = vcmp.lt.s32.totalorder %v740, 7
        %v772 = vsel %vm771, 1, 0
        %vm773 = vcmp.eq.s32.totalorder %v772, 1
        %v774 = vsel %vm773, %v763, 0.0
        %v775 = vsel %vm773, %v764, 0.0
        %v776 = vsel %vm773, %v765, 0.0
        %v777 = vsel %vm773, %v766, 0.0
        %v778 = vsel %vm773, %v767, 0.0
        %v779 = vsel %vm773, %v768, 0.0
        %v780 = vsel %vm773, %v769, 0.0
        %v781 = vsel %vm773, %v770, 0.0
        %v782 = vlaneseq
        %v783 = vshrl.u32 %v782, 7
        %v784 = vsub.s32 3, %v783
        %v785 = vrot.slane %v741, %v784
        %v786 = vmul.f32 %v755, %v785
        %v787 = vmul.f32 %v756, %v785
        %v788 = vmul.f32 %v757, %v785
        %v789 = vmul.f32 %v758, %v785
        %v790 = vmul.f32 %v759, %v785
        %v791 = vmul.f32 %v760, %v785
        %v792 = vmul.f32 %v761, %v785
        %v793 = vmul.f32 %v762, %v785
        %v794 = vlaneseq
        %v795 = vshrl.u32 %v794, 7
        %v796 = vsub.s32 4, %v795
        %v797 = vrot.slane %v741, %v796
        %v798 = vmul.f32 %v587, %v797
        %v799 = vmul.f32 %v592, %v797
        %v800 = vmul.f32 %v597, %v797
        %v801 = vmul.f32 %v602, %v797
        %v802 = vmul.f32 %v607, %v797
        %v803 = vmul.f32 %v612, %v797
        %v804 = vmul.f32 %v617, %v797
        %v805 = vmul.f32 %v622, %v797
        %v806 = vadd.f32 %v786, %v798
        %v807 = vadd.f32 %v787, %v799
        %v808 = vadd.f32 %v788, %v800
        %v809 = vadd.f32 %v789, %v801
        %v810 = vadd.f32 %v790, %v802
        %v811 = vadd.f32 %v791, %v803
        %v812 = vadd.f32 %v792, %v804
        %v813 = vadd.f32 %v793, %v805
        %v814 = vlaneseq
        %v815 = vshrl.u32 %v814, 7
        %v816 = vsub.s32 5, %v815
        %v817 = vrot.slane %v741, %v816
        %v818 = vmul.f32 %v774, %v817
        %v819 = vmul.f32 %v775, %v817
        %v820 = vmul.f32 %v776, %v817
        %v821 = vmul.f32 %v777, %v817
        %v822 = vmul.f32 %v778, %v817
        %v823 = vmul.f32 %v779, %v817
        %v824 = vmul.f32 %v780, %v817
        %v825 = vmul.f32 %v781, %v817
        %v826 = vadd.f32 %v806, %v818
        %v827 = vadd.f32 %v807, %v819
        %v828 = vadd.f32 %v808, %v820
        %v829 = vadd.f32 %v809, %v821
        %v830 = vadd.f32 %v810, %v822
        %v831 = vadd.f32 %v811, %v823
        %v832 = vadd.f32 %v812, %v824
        %v833 = vadd.f32 %v813, %v825
        %v835 = vlaneseq
        %v836 = vshrl.u32 %v835, 7
        %v837 = vsub.s32 0, %v836
        %v838 = vrot.slane %v743, %v837
        %v840 = vadd.f32 %v826, %v838
        %v841 = vadd.f32 %v827, %v838
        %v842 = vadd.f32 %v828, %v838
        %v843 = vadd.f32 %v829, %v838
        %v844 = vadd.f32 %v830, %v838
        %v845 = vadd.f32 %v831, %v838
        %v846 = vadd.f32 %v832, %v838
        %v847 = vadd.f32 %v833, %v838
        %848 = vst.msk [vmem:[#allocation2] sm:$0xff] %vm355, %v840
        %849 = vst.msk [vmem:[#allocation2 + $0x8] sm:$0xff] %vm355, %v841
        %850 = vst.msk [vmem:[#allocation2 + $0x10] sm:$0xff] %vm355, %v842
        %851 = vst.msk [vmem:[#allocation2 + $0x18] sm:$0xff] %vm355, %v843
        %852 = vst.msk [vmem:[#allocation2 + $0x20] sm:$0xff] %vm355, %v844
        %853 = vst.msk [vmem:[#allocation2 + $0x28] sm:$0xff] %vm355, %v845
        %854 = vst.msk [vmem:[#allocation2 + $0x30] sm:$0xff] %vm355, %v846
        %855 = vst.msk [vmem:[#allocation2 + $0x38] sm:$0xff] %vm355, %v847
        %v856 = vlaneseq
        %v857 = vshrl.u32 %v856, 7
        %v858 = vsub.s32 0, %v857
        %v859 = vrot.slane %v741, %v858
        %v860 = vmul.f32 %v755, %v859
        %v861 = vmul.f32 %v756, %v859
        %v862 = vmul.f32 %v757, %v859
        %v863 = vmul.f32 %v758, %v859
        %v864 = vmul.f32 %v759, %v859
        %v865 = vmul.f32 %v760, %v859
        %v866 = vmul.f32 %v761, %v859
        %v867 = vlaneseq
        %v868 = vshrl.u32 %v867, 7
        %v869 = vsub.s32 1, %v868
        %v870 = vrot.slane %v741, %v869
        %v871 = vmul.f32 %v587, %v870
        %v872 = vmul.f32 %v592, %v870
        %v873 = vmul.f32 %v597, %v870
        %v874 = vmul.f32 %v602, %v870
        %v875 = vmul.f32 %v607, %v870
        %v876 = vmul.f32 %v612, %v870
        %v877 = vmul.f32 %v617, %v870
        %v878 = vadd.f32 %v860, %v871
        %v879 = vadd.f32 %v861, %v872
        %v880 = vadd.f32 %v862, %v873
        %v881 = vadd.f32 %v863, %v874
        %v882 = vadd.f32 %v864, %v875
        %v883 = vadd.f32 %v865, %v876
        %v884 = vadd.f32 %v866, %v877
        %v885 = vlaneseq
        %v886 = vshrl.u32 %v885, 7
        %v887 = vsub.s32 2, %v886
        %v888 = vrot.slane %v741, %v887
        %v889 = vmul.f32 %v774, %v888
        %v890 = vmul.f32 %v775, %v888
        %v891 = vmul.f32 %v776, %v888
        %v892 = vmul.f32 %v777, %v888
        %v893 = vmul.f32 %v778, %v888
        %v894 = vmul.f32 %v779, %v888
        %v895 = vmul.f32 %v780, %v888
        %v896 = vadd.f32 %v878, %v889
        %v897 = vadd.f32 %v879, %v890
        %v898 = vadd.f32 %v880, %v891
        %v899 = vadd.f32 %v881, %v892
        %v900 = vadd.f32 %v882, %v893
        %v901 = vadd.f32 %v883, %v894
        %v902 = vadd.f32 %v884, %v895
        %s903 = scalar_lea.vmem [#allocation2], 8
        %v904 = vld [vmem:[%s903] sm:$0xff]
        %v905 = vld [vmem:[%s903 + $0x8] sm:$0xff]
        %v906 = vld [vmem:[%s903 + $0x10] sm:$0xff]
        %v907 = vld [vmem:[%s903 + $0x18] sm:$0xff]
        %v908 = vld [vmem:[%s903 + $0x20] sm:$0xff]
        %v909 = vld [vmem:[%s903 + $0x28] sm:$0xff]
        %v910 = vld [vmem:[%s903 + $0x30] sm:$0xff]
        %v911 = vadd.f32 %v904, %v896
        %v912 = vadd.f32 %v905, %v897
        %v913 = vadd.f32 %v906, %v898
        %v914 = vadd.f32 %v907, %v899
        %v915 = vadd.f32 %v908, %v900
        %v916 = vadd.f32 %v909, %v901
        %v917 = vadd.f32 %v910, %v902
        %918 = vst.msk [vmem:[%s903] sm:$0xff] %vm355, %v911
        %919 = vst.msk [vmem:[%s903 + $0x8] sm:$0xff] %vm355, %v912
        %920 = vst.msk [vmem:[%s903 + $0x10] sm:$0xff] %vm355, %v913
        %921 = vst.msk [vmem:[%s903 + $0x18] sm:$0xff] %vm355, %v914
        %922 = vst.msk [vmem:[%s903 + $0x20] sm:$0xff] %vm355, %v915
        %923 = vst.msk [vmem:[%s903 + $0x28] sm:$0xff] %vm355, %v916
        %924 = vst.msk [vmem:[%s903 + $0x30] sm:$0xff] %vm355, %v917
        %v925 = vlaneseq
        %v926 = vshrl.u32 %v925, 7
        %v927 = vsub.s32 6, %v926
        %v928 = vrot.slane %v741, %v927
        %v929 = vmul.f32 %v756, %v928
        %v930 = vmul.f32 %v757, %v928
        %v931 = vmul.f32 %v758, %v928
        %v932 = vmul.f32 %v759, %v928
        %v933 = vmul.f32 %v760, %v928
        %v934 = vmul.f32 %v761, %v928
        %v935 = vmul.f32 %v762, %v928
        %v936 = vlaneseq
        %v937 = vshrl.u32 %v936, 7
        %v938 = vsub.s32 7, %v937
        %v939 = vrot.slane %v741, %v938
        %v940 = vmul.f32 %v592, %v939
        %v941 = vmul.f32 %v597, %v939
        %v942 = vmul.f32 %v602, %v939
        %v943 = vmul.f32 %v607, %v939
        %v944 = vmul.f32 %v612, %v939
        %v945 = vmul.f32 %v617, %v939
        %v946 = vmul.f32 %v622, %v939
        %v947 = vadd.f32 %v929, %v940
        %v948 = vadd.f32 %v930, %v941
        %v949 = vadd.f32 %v931, %v942
        %v950 = vadd.f32 %v932, %v943
        %v951 = vadd.f32 %v933, %v944
        %v952 = vadd.f32 %v934, %v945
        %v953 = vadd.f32 %v935, %v946
        %v954 = vlaneseq
        %v955 = vshrl.u32 %v954, 7
        %v956 = vsub.s32 0, %v955
        %v957 = vrot.slane %v742, %v956
        %v958 = vmul.f32 %v775, %v957
        %v959 = vmul.f32 %v776, %v957
        %v960 = vmul.f32 %v777, %v957
        %v961 = vmul.f32 %v778, %v957
        %v962 = vmul.f32 %v779, %v957
        %v963 = vmul.f32 %v780, %v957
        %v964 = vmul.f32 %v781, %v957
        %v965 = vadd.f32 %v947, %v958
        %v966 = vadd.f32 %v948, %v959
        %v967 = vadd.f32 %v949, %v960
        %v968 = vadd.f32 %v950, %v961
        %v969 = vadd.f32 %v951, %v962
        %v970 = vadd.f32 %v952, %v963
        %v971 = vadd.f32 %v953, %v964
        %v972 = vld [vmem:[#allocation2] sm:$0xff]
        %v973 = vld [vmem:[#allocation2 + $0x8] sm:$0xff]
        %v974 = vld [vmem:[#allocation2 + $0x10] sm:$0xff]
        %v975 = vld [vmem:[#allocation2 + $0x18] sm:$0xff]
        %v976 = vld [vmem:[#allocation2 + $0x20] sm:$0xff]
        %v977 = vld [vmem:[#allocation2 + $0x28] sm:$0xff]
        %v978 = vld [vmem:[#allocation2 + $0x30] sm:$0xff]
        %v979 = vadd.f32 %v972, %v965
        %v980 = vadd.f32 %v973, %v966
        %v981 = vadd.f32 %v974, %v967
        %v982 = vadd.f32 %v975, %v968
        %v983 = vadd.f32 %v976, %v969
        %v984 = vadd.f32 %v977, %v970
        %v985 = vadd.f32 %v978, %v971
        %986 = vst.msk [vmem:[#allocation2] sm:$0xff] %vm355, %v979
        %987 = vst.msk [vmem:[#allocation2 + $0x8] sm:$0xff] %vm355, %v980
        %988 = vst.msk [vmem:[#allocation2 + $0x10] sm:$0xff] %vm355, %v981
        %989 = vst.msk [vmem:[#allocation2 + $0x18] sm:$0xff] %vm355, %v982
        %990 = vst.msk [vmem:[#allocation2 + $0x20] sm:$0xff] %vm355, %v983
        %991 = vst.msk [vmem:[#allocation2 + $0x28] sm:$0xff] %vm355, %v984
        %992 = vst.msk [vmem:[#allocation2 + $0x30] sm:$0xff] %vm355, %v985
        %v993 = vld [vmem:[#allocation2] sm:$0xff]
        %v994 = vld [vmem:[#allocation2 + $0x8] sm:$0xff]
        %v995 = vld [vmem:[#allocation2 + $0x10] sm:$0xff]
        %v996 = vld [vmem:[#allocation2 + $0x18] sm:$0xff]
        %v997 = vld [vmem:[#allocation2 + $0x20] sm:$0xff]
        %v998 = vld [vmem:[#allocation2 + $0x28] sm:$0xff]
        %v999 = vld [vmem:[#allocation2 + $0x30] sm:$0xff]
        %v1000 = vld [vmem:[#allocation2 + $0x38] sm:$0xff]
        %vm1001 = vcmp.gt.f32.partialorder %v993, 0.0
        %vm1002 = vcmp.gt.f32.partialorder %v994, 0.0
        %vm1003 = vcmp.gt.f32.partialorder %v995, 0.0
        %vm1004 = vcmp.gt.f32.partialorder %v996, 0.0
        %vm1005 = vcmp.gt.f32.partialorder %v997, 0.0
        %vm1006 = vcmp.gt.f32.partialorder %v998, 0.0
        %vm1007 = vcmp.gt.f32.partialorder %v999, 0.0
        %vm1008 = vcmp.gt.f32.partialorder %v1000, 0.0
        %v1009 = vmul.f32 %v993, 0.01
        %v1010 = vmul.f32 %v994, 0.01
        %v1011 = vmul.f32 %v995, 0.01
        %v1012 = vmul.f32 %v996, 0.01
        %v1013 = vmul.f32 %v997, 0.01
        %v1014 = vmul.f32 %v998, 0.01
        %v1015 = vmul.f32 %v999, 0.01
        %v1016 = vmul.f32 %v1000, 0.01
        %v1017 = vsel %vm1001, %v993, %v1009
        %v1018 = vsel %vm1002, %v994, %v1010
        %v1019 = vsel %vm1003, %v995, %v1011
        %v1020 = vsel %vm1004, %v996, %v1012
        %v1021 = vsel %vm1005, %v997, %v1013
        %v1022 = vsel %vm1006, %v998, %v1014
        %v1023 = vsel %vm1007, %v999, %v1015
        %v1024 = vsel %vm1008, %v1000, %v1016
        %v1025 = vld [vmem:[%s5] sm:$0xff]
        %v1026 = vld [vmem:[%s5 + $0x8] sm:$0xff]
        %v1027 = vld [vmem:[%s5 + $0x10] sm:$0xff]
        %v1028 = vld [vmem:[%s5 + $0x18] sm:$0x1]
        %v1029 = vld [vmem:[%s6] sm:$0x1]
        %v1030 = vrot.slane %v701, 6
        %v1031 = vrot.slane %v706, 6
        %v1032 = vrot.slane %v711, 6
        %v1033 = vrot.slane %v716, 6
        %v1034 = vrot.slane %v721, 6
        %v1035 = vrot.slane %v726, 6
        %v1036 = vrot.slane %v731, 6
        %v1037 = vrot.slane %v736, 6
        %vm1038 = vcmp.ge.s32.totalorder %v740, 2
        %v1039 = vsel %vm1038, 1, 0
        %vm1040 = vcmp.eq.s32.totalorder %v1039, 1
        %v1041 = vsel %vm1040, %v1030, 0.0
        %v1042 = vsel %vm1040, %v1031, 0.0
        %v1043 = vsel %vm1040, %v1032, 0.0
        %v1044 = vsel %vm1040, %v1033, 0.0
        %v1045 = vsel %vm1040, %v1034, 0.0
        %v1046 = vsel %vm1040, %v1035, 0.0
        %v1047 = vsel %vm1040, %v1036, 0.0
        %v1048 = vsel %vm1040, %v1037, 0.0
        %v1049 = vrot.slane %v701, 7
        %v1050 = vrot.slane %v706, 7
        %v1051 = vrot.slane %v711, 7
        %v1052 = vrot.slane %v716, 7
        %v1053 = vrot.slane %v721, 7
        %v1054 = vrot.slane %v726, 7
        %v1055 = vrot.slane %v731, 7
        %v1056 = vrot.slane %v736, 7
        %v1057 = vsel %vm754, %v1049, 0.0
        %v1058 = vsel %vm754, %v1050, 0.0
        %v1059 = vsel %vm754, %v1051, 0.0
        %v1060 = vsel %vm754, %v1052, 0.0
        %v1061 = vsel %vm754, %v1053, 0.0
        %v1062 = vsel %vm754, %v1054, 0.0
        %v1063 = vsel %vm754, %v1055, 0.0
        %v1064 = vsel %vm754, %v1056, 0.0
        %v1065 = vrot.slane %v701, 1
        %v1066 = vrot.slane %v706, 1
        %v1067 = vrot.slane %v711, 1
        %v1068 = vrot.slane %v716, 1
        %v1069 = vrot.slane %v721, 1
        %v1070 = vrot.slane %v726, 1
        %v1071 = vrot.slane %v731, 1
        %v1072 = vrot.slane %v736, 1
        %v1073 = vsel %vm773, %v1065, 0.0
        %v1074 = vsel %vm773, %v1066, 0.0
        %v1075 = vsel %vm773, %v1067, 0.0
        %v1076 = vsel %vm773, %v1068, 0.0
        %v1077 = vsel %vm773, %v1069, 0.0
        %v1078 = vsel %vm773, %v1070, 0.0
        %v1079 = vsel %vm773, %v1071, 0.0
        %v1080 = vsel %vm773, %v1072, 0.0
        %v1081 = vrot.slane %v701, 2
        %v1082 = vrot.slane %v706, 2
        %v1083 = vrot.slane %v711, 2
        %v1084 = vrot.slane %v716, 2
        %v1085 = vrot.slane %v721, 2
        %v1086 = vrot.slane %v726, 2
        %v1087 = vrot.slane %v731, 2
        %v1088 = vrot.slane %v736, 2
        %vm1089 = vcmp.lt.s32.totalorder %v740, 6
        %v1090 = vsel %vm1089, 1, 0
        %vm1091 = vcmp.eq.s32.totalorder %v1090, 1
        %v1092 = vsel %vm1091, %v1081, 0.0
        %v1093 = vsel %vm1091, %v1082, 0.0
        %v1094 = vsel %vm1091, %v1083, 0.0
        %v1095 = vsel %vm1091, %v1084, 0.0
        %v1096 = vsel %vm1091, %v1085, 0.0
        %v1097 = vsel %vm1091, %v1086, 0.0
        %v1098 = vsel %vm1091, %v1087, 0.0
        %v1099 = vsel %vm1091, %v1088, 0.0
        %v1100 = vlaneseq
        %v1101 = vshrl.u32 %v1100, 7
        %v1102 = vsub.s32 2, %v1101
        %v1103 = vrot.slane %v1026, %v1102
        %v1104 = vmul.f32 %v1041, %v1103
        %v1105 = vmul.f32 %v1042, %v1103
        %v1106 = vmul.f32 %v1043, %v1103
        %v1107 = vmul.f32 %v1044, %v1103
        %v1108 = vmul.f32 %v1045, %v1103
        %v1109 = vmul.f32 %v1046, %v1103
        %v1110 = vmul.f32 %v1047, %v1103
        %v1111 = vmul.f32 %v1048, %v1103
        %v1112 = vlaneseq
        %v1113 = vshrl.u32 %v1112, 7
        %v1114 = vsub.s32 3, %v1113
        %v1115 = vrot.slane %v1026, %v1114
        %v1116 = vmul.f32 %v1057, %v1115
        %v1117 = vmul.f32 %v1058, %v1115
        %v1118 = vmul.f32 %v1059, %v1115
        %v1119 = vmul.f32 %v1060, %v1115
        %v1120 = vmul.f32 %v1061, %v1115
        %v1121 = vmul.f32 %v1062, %v1115
        %v1122 = vmul.f32 %v1063, %v1115
        %v1123 = vmul.f32 %v1064, %v1115
        %v1124 = vadd.f32 %v1104, %v1116
        %v1125 = vadd.f32 %v1105, %v1117
        %v1126 = vadd.f32 %v1106, %v1118
        %v1127 = vadd.f32 %v1107, %v1119
        %v1128 = vadd.f32 %v1108, %v1120
        %v1129 = vadd.f32 %v1109, %v1121
        %v1130 = vadd.f32 %v1110, %v1122
        %v1131 = vadd.f32 %v1111, %v1123
        %v1132 = vlaneseq
        %v1133 = vshrl.u32 %v1132, 7
        %v1134 = vsub.s32 4, %v1133
        %v1135 = vrot.slane %v1026, %v1134
        %v1136 = vmul.f32 %v701, %v1135
        %v1137 = vmul.f32 %v706, %v1135
        %v1138 = vmul.f32 %v711, %v1135
        %v1139 = vmul.f32 %v716, %v1135
        %v1140 = vmul.f32 %v721, %v1135
        %v1141 = vmul.f32 %v726, %v1135
        %v1142 = vmul.f32 %v731, %v1135
        %v1143 = vmul.f32 %v736, %v1135
        %v1144 = vadd.f32 %v1124, %v1136
        %v1145 = vadd.f32 %v1125, %v1137
        %v1146 = vadd.f32 %v1126, %v1138
        %v1147 = vadd.f32 %v1127, %v1139
        %v1148 = vadd.f32 %v1128, %v1140
        %v1149 = vadd.f32 %v1129, %v1141
        %v1150 = vadd.f32 %v1130, %v1142
        %v1151 = vadd.f32 %v1131, %v1143
        %v1152 = vlaneseq
        %v1153 = vshrl.u32 %v1152, 7
        %v1154 = vsub.s32 5, %v1153
        %v1155 = vrot.slane %v1026, %v1154
        %v1156 = vmul.f32 %v1073, %v1155
        %v1157 = vmul.f32 %v1074, %v1155
        %v1158 = vmul.f32 %v1075, %v1155
        %v1159 = vmul.f32 %v1076, %v1155
        %v1160 = vmul.f32 %v1077, %v1155
        %v1161 = vmul.f32 %v1078, %v1155
        %v1162 = vmul.f32 %v1079, %v1155
        %v1163 = vmul.f32 %v1080, %v1155
        %v1164 = vadd.f32 %v1144, %v1156
        %v1165 = vadd.f32 %v1145, %v1157
        %v1166 = vadd.f32 %v1146, %v1158
        %v1167 = vadd.f32 %v1147, %v1159
        %v1168 = vadd.f32 %v1148, %v1160
        %v1169 = vadd.f32 %v1149, %v1161
        %v1170 = vadd.f32 %v1150, %v1162
        %v1171 = vadd.f32 %v1151, %v1163
        %v1172 = vlaneseq
        %v1173 = vshrl.u32 %v1172, 7
        %v1174 = vsub.s32 6, %v1173
        %v1175 = vrot.slane %v1026, %v1174
        %v1176 = vmul.f32 %v1092, %v1175
        %v1177 = vmul.f32 %v1093, %v1175
        %v1178 = vmul.f32 %v1094, %v1175
        %v1179 = vmul.f32 %v1095, %v1175
        %v1180 = vmul.f32 %v1096, %v1175
        %v1181 = vmul.f32 %v1097, %v1175
        %v1182 = vmul.f32 %v1098, %v1175
        %v1183 = vmul.f32 %v1099, %v1175
        %v1184 = vadd.f32 %v1164, %v1176
        %v1185 = vadd.f32 %v1165, %v1177
        %v1186 = vadd.f32 %v1166, %v1178
        %v1187 = vadd.f32 %v1167, %v1179
        %v1188 = vadd.f32 %v1168, %v1180
        %v1189 = vadd.f32 %v1169, %v1181
        %v1190 = vadd.f32 %v1170, %v1182
        %v1191 = vadd.f32 %v1171, %v1183
        %v1193 = vlaneseq
        %v1194 = vshrl.u32 %v1193, 7
        %v1195 = vsub.s32 0, %v1194
        %v1196 = vrot.slane %v1029, %v1195
        %v1198 = vadd.f32 %v1184, %v1196
        %v1199 = vadd.f32 %v1185, %v1196
        %v1200 = vadd.f32 %v1186, %v1196
        %v1201 = vadd.f32 %v1187, %v1196
        %v1202 = vadd.f32 %v1188, %v1196
        %v1203 = vadd.f32 %v1189, %v1196
        %v1204 = vadd.f32 %v1190, %v1196
        %v1205 = vadd.f32 %v1191, %v1196
        %1206 = vst.msk [vmem:[#allocation2] sm:$0xff] %vm355, %v1198
        %1207 = vst.msk [vmem:[#allocation2 + $0x8] sm:$0xff] %vm355, %v1199
        %1208 = vst.msk [vmem:[#allocation2 + $0x10] sm:$0xff] %vm355, %v1200
        %1209 = vst.msk [vmem:[#allocation2 + $0x18] sm:$0xff] %vm355, %v1201
        %1210 = vst.msk [vmem:[#allocation2 + $0x20] sm:$0xff] %vm355, %v1202
        %1211 = vst.msk [vmem:[#allocation2 + $0x28] sm:$0xff] %vm355, %v1203
        %1212 = vst.msk [vmem:[#allocation2 + $0x30] sm:$0xff] %vm355, %v1204
        %1213 = vst.msk [vmem:[#allocation2 + $0x38] sm:$0xff] %vm355, %v1205
        %v1214 = vlaneseq
        %v1215 = vshrl.u32 %v1214, 7
        %v1216 = vsub.s32 0, %v1215
        %v1217 = vrot.slane %v1025, %v1216
        %v1218 = vmul.f32 %v1041, %v1217
        %v1219 = vmul.f32 %v1042, %v1217
        %v1220 = vmul.f32 %v1043, %v1217
        %v1221 = vmul.f32 %v1044, %v1217
        %v1222 = vmul.f32 %v1045, %v1217
        %v1223 = vmul.f32 %v1046, %v1217
        %v1224 = vlaneseq
        %v1225 = vshrl.u32 %v1224, 7
        %v1226 = vsub.s32 1, %v1225
        %v1227 = vrot.slane %v1025, %v1226
        %v1228 = vmul.f32 %v1057, %v1227
        %v1229 = vmul.f32 %v1058, %v1227
        %v1230 = vmul.f32 %v1059, %v1227
        %v1231 = vmul.f32 %v1060, %v1227
        %v1232 = vmul.f32 %v1061, %v1227
        %v1233 = vmul.f32 %v1062, %v1227
        %v1234 = vadd.f32 %v1218, %v1228
        %v1235 = vadd.f32 %v1219, %v1229
        %v1236 = vadd.f32 %v1220, %v1230
        %v1237 = vadd.f32 %v1221, %v1231
        %v1238 = vadd.f32 %v1222, %v1232
        %v1239 = vadd.f32 %v1223, %v1233
        %v1240 = vlaneseq
        %v1241 = vshrl.u32 %v1240, 7
        %v1242 = vsub.s32 2, %v1241
        %v1243 = vrot.slane %v1025, %v1242
        %v1244 = vmul.f32 %v701, %v1243
        %v1245 = vmul.f32 %v706, %v1243
        %v1246 = vmul.f32 %v711, %v1243
        %v1247 = vmul.f32 %v716, %v1243
        %v1248 = vmul.f32 %v721, %v1243
        %v1249 = vmul.f32 %v726, %v1243
        %v1250 = vadd.f32 %v1234, %v1244
        %v1251 = vadd.f32 %v1235, %v1245
        %v1252 = vadd.f32 %v1236, %v1246
        %v1253 = vadd.f32 %v1237, %v1247
        %v1254 = vadd.f32 %v1238, %v1248
        %v1255 = vadd.f32 %v1239, %v1249
        %v1256 = vlaneseq
        %v1257 = vshrl.u32 %v1256, 7
        %v1258 = vsub.s32 3, %v1257
        %v1259 = vrot.slane %v1025, %v1258
        %v1260 = vmul.f32 %v1073, %v1259
        %v1261 = vmul.f32 %v1074, %v1259
        %v1262 = vmul.f32 %v1075, %v1259
        %v1263 = vmul.f32 %v1076, %v1259
        %v1264 = vmul.f32 %v1077, %v1259
        %v1265 = vmul.f32 %v1078, %v1259
        %v1266 = vadd.f32 %v1250, %v1260
        %v1267 = vadd.f32 %v1251, %v1261
        %v1268 = vadd.f32 %v1252, %v1262
        %v1269 = vadd.f32 %v1253, %v1263
        %v1270 = vadd.f32 %v1254, %v1264
        %v1271 = vadd.f32 %v1255, %v1265
        %v1272 = vlaneseq
        %v1273 = vshrl.u32 %v1272, 7
        %v1274 = vsub.s32 4, %v1273
        %v1275 = vrot.slane %v1025, %v1274
        %v1276 = vmul.f32 %v1092, %v1275
        %v1277 = vmul.f32 %v1093, %v1275
        %v1278 = vmul.f32 %v1094, %v1275
        %v1279 = vmul.f32 %v1095, %v1275
        %v1280 = vmul.f32 %v1096, %v1275
        %v1281 = vmul.f32 %v1097, %v1275
        %v1282 = vadd.f32 %v1266, %v1276
        %v1283 = vadd.f32 %v1267, %v1277
        %v1284 = vadd.f32 %v1268, %v1278
        %v1285 = vadd.f32 %v1269, %v1279
        %v1286 = vadd.f32 %v1270, %v1280
        %v1287 = vadd.f32 %v1271, %v1281
        %s1288 = scalar_lea.vmem [#allocation2], 16
        %v1289 = vld [vmem:[%s1288] sm:$0xff]
        %v1290 = vld [vmem:[%s1288 + $0x8] sm:$0xff]
        %v1291 = vld [vmem:[%s1288 + $0x10] sm:$0xff]
        %v1292 = vld [vmem:[%s1288 + $0x18] sm:$0xff]
        %v1293 = vld [vmem:[%s1288 + $0x20] sm:$0xff]
        %v1294 = vld [vmem:[%s1288 + $0x28] sm:$0xff]
        %v1295 = vadd.f32 %v1289, %v1282
        %v1296 = vadd.f32 %v1290, %v1283
        %v1297 = vadd.f32 %v1291, %v1284
        %v1298 = vadd.f32 %v1292, %v1285
        %v1299 = vadd.f32 %v1293, %v1286
        %v1300 = vadd.f32 %v1294, %v1287
        %1301 = vst.msk [vmem:[%s1288] sm:$0xff] %vm355, %v1295
        %1302 = vst.msk [vmem:[%s1288 + $0x8] sm:$0xff] %vm355, %v1296
        %1303 = vst.msk [vmem:[%s1288 + $0x10] sm:$0xff] %vm355, %v1297
        %1304 = vst.msk [vmem:[%s1288 + $0x18] sm:$0xff] %vm355, %v1298
        %1305 = vst.msk [vmem:[%s1288 + $0x20] sm:$0xff] %vm355, %v1299
        %1306 = vst.msk [vmem:[%s1288 + $0x28] sm:$0xff] %vm355, %v1300
        %v1307 = vlaneseq
        %v1308 = vshrl.u32 %v1307, 7
        %v1309 = vsub.s32 5, %v1308
        %v1310 = vrot.slane %v1025, %v1309
        %v1311 = vmul.f32 %v1041, %v1310
        %v1312 = vmul.f32 %v1042, %v1310
        %v1313 = vmul.f32 %v1043, %v1310
        %v1314 = vmul.f32 %v1044, %v1310
        %v1315 = vmul.f32 %v1045, %v1310
        %v1316 = vmul.f32 %v1046, %v1310
        %v1317 = vmul.f32 %v1047, %v1310
        %v1318 = vlaneseq
        %v1319 = vshrl.u32 %v1318, 7
        %v1320 = vsub.s32 6, %v1319
        %v1321 = vrot.slane %v1025, %v1320
        %v1322 = vmul.f32 %v1057, %v1321
        %v1323 = vmul.f32 %v1058, %v1321
        %v1324 = vmul.f32 %v1059, %v1321
        %v1325 = vmul.f32 %v1060, %v1321
        %v1326 = vmul.f32 %v1061, %v1321
        %v1327 = vmul.f32 %v1062, %v1321
        %v1328 = vmul.f32 %v1063, %v1321
        %v1329 = vadd.f32 %v1311, %v1322
        %v1330 = vadd.f32 %v1312, %v1323
        %v1331 = vadd.f32 %v1313, %v1324
        %v1332 = vadd.f32 %v1314, %v1325
        %v1333 = vadd.f32 %v1315, %v1326
        %v1334 = vadd.f32 %v1316, %v1327
        %v1335 = vadd.f32 %v1317, %v1328
        %v1336 = vlaneseq
        %v1337 = vshrl.u32 %v1336, 7
        %v1338 = vsub.s32 7, %v1337
        %v1339 = vrot.slane %v1025, %v1338
        %v1340 = vmul.f32 %v701, %v1339
        %v1341 = vmul.f32 %v706, %v1339
        %v1342 = vmul.f32 %v711, %v1339
        %v1343 = vmul.f32 %v716, %v1339
        %v1344 = vmul.f32 %v721, %v1339
        %v1345 = vmul.f32 %v726, %v1339
        %v1346 = vmul.f32 %v731, %v1339
        %v1347 = vadd.f32 %v1329, %v1340
        %v1348 = vadd.f32 %v1330, %v1341
        %v1349 = vadd.f32 %v1331, %v1342
        %v1350 = vadd.f32 %v1332, %v1343
        %v1351 = vadd.f32 %v1333, %v1344
        %v1352 = vadd.f32 %v1334, %v1345
        %v1353 = vadd.f32 %v1335, %v1346
        %v1354 = vlaneseq
        %v1355 = vshrl.u32 %v1354, 7
        %v1356 = vsub.s32 0, %v1355
        %v1357 = vrot.slane %v1026, %v1356
        %v1358 = vmul.f32 %v1073, %v1357
        %v1359 = vmul.f32 %v1074, %v1357
        %v1360 = vmul.f32 %v1075, %v1357
        %v1361 = vmul.f32 %v1076, %v1357
        %v1362 = vmul.f32 %v1077, %v1357
        %v1363 = vmul.f32 %v1078, %v1357
        %v1364 = vmul.f32 %v1079, %v1357
        %v1365 = vadd.f32 %v1347, %v1358
        %v1366 = vadd.f32 %v1348, %v1359
        %v1367 = vadd.f32 %v1349, %v1360
        %v1368 = vadd.f32 %v1350, %v1361
        %v1369 = vadd.f32 %v1351, %v1362
        %v1370 = vadd.f32 %v1352, %v1363
        %v1371 = vadd.f32 %v1353, %v1364
        %v1372 = vlaneseq
        %v1373 = vshrl.u32 %v1372, 7
        %v1374 = vsub.s32 1, %v1373
        %v1375 = vrot.slane %v1026, %v1374
        %v1376 = vmul.f32 %v1092, %v1375
        %v1377 = vmul.f32 %v1093, %v1375
        %v1378 = vmul.f32 %v1094, %v1375
        %v1379 = vmul.f32 %v1095, %v1375
        %v1380 = vmul.f32 %v1096, %v1375
        %v1381 = vmul.f32 %v1097, %v1375
        %v1382 = vmul.f32 %v1098, %v1375
        %v1383 = vadd.f32 %v1365, %v1376
        %v1384 = vadd.f32 %v1366, %v1377
        %v1385 = vadd.f32 %v1367, %v1378
        %v1386 = vadd.f32 %v1368, %v1379
        %v1387 = vadd.f32 %v1369, %v1380
        %v1388 = vadd.f32 %v1370, %v1381
        %v1389 = vadd.f32 %v1371, %v1382
        %v1390 = vld [vmem:[%s903] sm:$0xff]
        %v1391 = vld [vmem:[%s903 + $0x8] sm:$0xff]
        %v1392 = vld [vmem:[%s903 + $0x10] sm:$0xff]
        %v1393 = vld [vmem:[%s903 + $0x18] sm:$0xff]
        %v1394 = vld [vmem:[%s903 + $0x20] sm:$0xff]
        %v1395 = vld [vmem:[%s903 + $0x28] sm:$0xff]
        %v1396 = vld [vmem:[%s903 + $0x30] sm:$0xff]
        %v1397 = vadd.f32 %v1390, %v1383
        %v1398 = vadd.f32 %v1391, %v1384
        %v1399 = vadd.f32 %v1392, %v1385
        %v1400 = vadd.f32 %v1393, %v1386
        %v1401 = vadd.f32 %v1394, %v1387
        %v1402 = vadd.f32 %v1395, %v1388
        %v1403 = vadd.f32 %v1396, %v1389
        %1404 = vst.msk [vmem:[%s903] sm:$0xff] %vm355, %v1397
        %1405 = vst.msk [vmem:[%s903 + $0x8] sm:$0xff] %vm355, %v1398
        %1406 = vst.msk [vmem:[%s903 + $0x10] sm:$0xff] %vm355, %v1399
        %1407 = vst.msk [vmem:[%s903 + $0x18] sm:$0xff] %vm355, %v1400
        %1408 = vst.msk [vmem:[%s903 + $0x20] sm:$0xff] %vm355, %v1401
        %1409 = vst.msk [vmem:[%s903 + $0x28] sm:$0xff] %vm355, %v1402
        %1410 = vst.msk [vmem:[%s903 + $0x30] sm:$0xff] %vm355, %v1403
        %v1411 = vlaneseq
        %v1412 = vshrl.u32 %v1411, 7
        %v1413 = vsub.s32 7, %v1412
        %v1414 = vrot.slane %v1026, %v1413
        %v1415 = vmul.f32 %v1042, %v1414
        %v1416 = vmul.f32 %v1043, %v1414
        %v1417 = vmul.f32 %v1044, %v1414
        %v1418 = vmul.f32 %v1045, %v1414
        %v1419 = vmul.f32 %v1046, %v1414
        %v1420 = vmul.f32 %v1047, %v1414
        %v1421 = vmul.f32 %v1048, %v1414
        %v1422 = vlaneseq
        %v1423 = vshrl.u32 %v1422, 7
        %v1424 = vsub.s32 0, %v1423
        %v1425 = vrot.slane %v1027, %v1424
        %v1426 = vmul.f32 %v1058, %v1425
        %v1427 = vmul.f32 %v1059, %v1425
        %v1428 = vmul.f32 %v1060, %v1425
        %v1429 = vmul.f32 %v1061, %v1425
        %v1430 = vmul.f32 %v1062, %v1425
        %v1431 = vmul.f32 %v1063, %v1425
        %v1432 = vmul.f32 %v1064, %v1425
        %v1433 = vadd.f32 %v1415, %v1426
        %v1434 = vadd.f32 %v1416, %v1427
        %v1435 = vadd.f32 %v1417, %v1428
        %v1436 = vadd.f32 %v1418, %v1429
        %v1437 = vadd.f32 %v1419, %v1430
        %v1438 = vadd.f32 %v1420, %v1431
        %v1439 = vadd.f32 %v1421, %v1432
        %v1440 = vlaneseq
        %v1441 = vshrl.u32 %v1440, 7
        %v1442 = vsub.s32 1, %v1441
        %v1443 = vrot.slane %v1027, %v1442
        %v1444 = vmul.f32 %v706, %v1443
        %v1445 = vmul.f32 %v711, %v1443
        %v1446 = vmul.f32 %v716, %v1443
        %v1447 = vmul.f32 %v721, %v1443
        %v1448 = vmul.f32 %v726, %v1443
        %v1449 = vmul.f32 %v731, %v1443
        %v1450 = vmul.f32 %v736, %v1443
        %v1451 = vadd.f32 %v1433, %v1444
        %v1452 = vadd.f32 %v1434, %v1445
        %v1453 = vadd.f32 %v1435, %v1446
        %v1454 = vadd.f32 %v1436, %v1447
        %v1455 = vadd.f32 %v1437, %v1448
        %v1456 = vadd.f32 %v1438, %v1449
        %v1457 = vadd.f32 %v1439, %v1450
        %v1458 = vlaneseq
        %v1459 = vshrl.u32 %v1458, 7
        %v1460 = vsub.s32 2, %v1459
        %v1461 = vrot.slane %v1027, %v1460
        %v1462 = vmul.f32 %v1074, %v1461
        %v1463 = vmul.f32 %v1075, %v1461
        %v1464 = vmul.f32 %v1076, %v1461
        %v1465 = vmul.f32 %v1077, %v1461
        %v1466 = vmul.f32 %v1078, %v1461
        %v1467 = vmul.f32 %v1079, %v1461
        %v1468 = vmul.f32 %v1080, %v1461
        %v1469 = vadd.f32 %v1451, %v1462
        %v1470 = vadd.f32 %v1452, %v1463
        %v1471 = vadd.f32 %v1453, %v1464
        %v1472 = vadd.f32 %v1454, %v1465
        %v1473 = vadd.f32 %v1455, %v1466
        %v1474 = vadd.f32 %v1456, %v1467
        %v1475 = vadd.f32 %v1457, %v1468
        %v1476 = vlaneseq
        %v1477 = vshrl.u32 %v1476, 7
        %v1478 = vsub.s32 3, %v1477
        %v1479 = vrot.slane %v1027, %v1478
        %v1480 = vmul.f32 %v1093, %v1479
        %v1481 = vmul.f32 %v1094, %v1479
        %v1482 = vmul.f32 %v1095, %v1479
        %v1483 = vmul.f32 %v1096, %v1479
        %v1484 = vmul.f32 %v1097, %v1479
        %v1485 = vmul.f32 %v1098, %v1479
        %v1486 = vmul.f32 %v1099, %v1479
        %v1487 = vadd.f32 %v1469, %v1480
        %v1488 = vadd.f32 %v1470, %v1481
        %v1489 = vadd.f32 %v1471, %v1482
        %v1490 = vadd.f32 %v1472, %v1483
        %v1491 = vadd.f32 %v1473, %v1484
        %v1492 = vadd.f32 %v1474, %v1485
        %v1493 = vadd.f32 %v1475, %v1486
        %v1494 = vld [vmem:[#allocation2] sm:$0xff]
        %v1495 = vld [vmem:[#allocation2 + $0x8] sm:$0xff]
        %v1496 = vld [vmem:[#allocation2 + $0x10] sm:$0xff]
        %v1497 = vld [vmem:[#allocation2 + $0x18] sm:$0xff]
        %v1498 = vld [vmem:[#allocation2 + $0x20] sm:$0xff]
        %v1499 = vld [vmem:[#allocation2 + $0x28] sm:$0xff]
        %v1500 = vld [vmem:[#allocation2 + $0x30] sm:$0xff]
        %v1501 = vadd.f32 %v1494, %v1487
        %v1502 = vadd.f32 %v1495, %v1488
        %v1503 = vadd.f32 %v1496, %v1489
        %v1504 = vadd.f32 %v1497, %v1490
        %v1505 = vadd.f32 %v1498, %v1491
        %v1506 = vadd.f32 %v1499, %v1492
        %v1507 = vadd.f32 %v1500, %v1493
        %1508 = vst.msk [vmem:[#allocation2] sm:$0xff] %vm355, %v1501
        %1509 = vst.msk [vmem:[#allocation2 + $0x8] sm:$0xff] %vm355, %v1502
        %1510 = vst.msk [vmem:[#allocation2 + $0x10] sm:$0xff] %vm355, %v1503
        %1511 = vst.msk [vmem:[#allocation2 + $0x18] sm:$0xff] %vm355, %v1504
        %1512 = vst.msk [vmem:[#allocation2 + $0x20] sm:$0xff] %vm355, %v1505
        %1513 = vst.msk [vmem:[#allocation2 + $0x28] sm:$0xff] %vm355, %v1506
        %1514 = vst.msk [vmem:[#allocation2 + $0x30] sm:$0xff] %vm355, %v1507
        %v1515 = vlaneseq
        %v1516 = vshrl.u32 %v1515, 7
        %v1517 = vsub.s32 4, %v1516
        %v1518 = vrot.slane %v1027, %v1517
        %v1519 = vmul.f32 %v1043, %v1518
        %v1520 = vmul.f32 %v1044, %v1518
        %v1521 = vmul.f32 %v1045, %v1518
        %v1522 = vmul.f32 %v1046, %v1518
        %v1523 = vmul.f32 %v1047, %v1518
        %v1524 = vmul.f32 %v1048, %v1518
        %v1525 = vlaneseq
        %v1526 = vshrl.u32 %v1525, 7
        %v1527 = vsub.s32 5, %v1526
        %v1528 = vrot.slane %v1027, %v1527
        %v1529 = vmul.f32 %v1059, %v1528
        %v1530 = vmul.f32 %v1060, %v1528
        %v1531 = vmul.f32 %v1061, %v1528
        %v1532 = vmul.f32 %v1062, %v1528
        %v1533 = vmul.f32 %v1063, %v1528
        %v1534 = vmul.f32 %v1064, %v1528
        %v1535 = vadd.f32 %v1519, %v1529
        %v1536 = vadd.f32 %v1520, %v1530
        %v1537 = vadd.f32 %v1521, %v1531
        %v1538 = vadd.f32 %v1522, %v1532
        %v1539 = vadd.f32 %v1523, %v1533
        %v1540 = vadd.f32 %v1524, %v1534
        %v1541 = vlaneseq
        %v1542 = vshrl.u32 %v1541, 7
        %v1543 = vsub.s32 6, %v1542
        %v1544 = vrot.slane %v1027, %v1543
        %v1545 = vmul.f32 %v711, %v1544
        %v1546 = vmul.f32 %v716, %v1544
        %v1547 = vmul.f32 %v721, %v1544
        %v1548 = vmul.f32 %v726, %v1544
        %v1549 = vmul.f32 %v731, %v1544
        %v1550 = vmul.f32 %v736, %v1544
        %v1551 = vadd.f32 %v1535, %v1545
        %v1552 = vadd.f32 %v1536, %v1546
        %v1553 = vadd.f32 %v1537, %v1547
        %v1554 = vadd.f32 %v1538, %v1548
        %v1555 = vadd.f32 %v1539, %v1549
        %v1556 = vadd.f32 %v1540, %v1550
        %v1557 = vlaneseq
        %v1558 = vshrl.u32 %v1557, 7
        %v1559 = vsub.s32 7, %v1558
        %v1560 = vrot.slane %v1027, %v1559
        %v1561 = vmul.f32 %v1075, %v1560
        %v1562 = vmul.f32 %v1076, %v1560
        %v1563 = vmul.f32 %v1077, %v1560
        %v1564 = vmul.f32 %v1078, %v1560
        %v1565 = vmul.f32 %v1079, %v1560
        %v1566 = vmul.f32 %v1080, %v1560
        %v1567 = vadd.f32 %v1551, %v1561
        %v1568 = vadd.f32 %v1552, %v1562
        %v1569 = vadd.f32 %v1553, %v1563
        %v1570 = vadd.f32 %v1554, %v1564
        %v1571 = vadd.f32 %v1555, %v1565
        %v1572 = vadd.f32 %v1556, %v1566
        %v1573 = vlaneseq
        %v1574 = vshrl.u32 %v1573, 7
        %v1575 = vsub.s32 0, %v1574
        %v1576 = vrot.slane %v1028, %v1575
        %v1577 = vmul.f32 %v1094, %v1576
        %v1578 = vmul.f32 %v1095, %v1576
        %v1579 = vmul.f32 %v1096, %v1576
        %v1580 = vmul.f32 %v1097, %v1576
        %v1581 = vmul.f32 %v1098, %v1576
        %v1582 = vmul.f32 %v1099, %v1576
        %v1583 = vadd.f32 %v1567, %v1577
        %v1584 = vadd.f32 %v1568, %v1578
        %v1585 = vadd.f32 %v1569, %v1579
        %v1586 = vadd.f32 %v1570, %v1580
        %v1587 = vadd.f32 %v1571, %v1581
        %v1588 = vadd.f32 %v1572, %v1582
        %v1589 = vld [vmem:[#allocation2] sm:$0xff]
        %v1590 = vld [vmem:[#allocation2 + $0x8] sm:$0xff]
        %v1591 = vld [vmem:[#allocation2 + $0x10] sm:$0xff]
        %v1592 = vld [vmem:[#allocation2 + $0x18] sm:$0xff]
        %v1593 = vld [vmem:[#allocation2 + $0x20] sm:$0xff]
        %v1594 = vld [vmem:[#allocation2 + $0x28] sm:$0xff]
        %v1595 = vadd.f32 %v1589, %v1583
        %v1596 = vadd.f32 %v1590, %v1584
        %v1597 = vadd.f32 %v1591, %v1585
        %v1598 = vadd.f32 %v1592, %v1586
        %v1599 = vadd.f32 %v1593, %v1587
        %v1600 = vadd.f32 %v1594, %v1588
        %1601 = vst.msk [vmem:[#allocation2] sm:$0xff] %vm355, %v1595
        %1602 = vst.msk [vmem:[#allocation2 + $0x8] sm:$0xff] %vm355, %v1596
        %1603 = vst.msk [vmem:[#allocation2 + $0x10] sm:$0xff] %vm355, %v1597
        %1604 = vst.msk [vmem:[#allocation2 + $0x18] sm:$0xff] %vm355, %v1598
        %1605 = vst.msk [vmem:[#allocation2 + $0x20] sm:$0xff] %vm355, %v1599
        %1606 = vst.msk [vmem:[#allocation2 + $0x28] sm:$0xff] %vm355, %v1600
        %v1607 = vld [vmem:[#allocation2] sm:$0xff]
        %v1608 = vld [vmem:[#allocation2 + $0x8] sm:$0xff]
        %v1609 = vld [vmem:[#allocation2 + $0x10] sm:$0xff]
        %v1610 = vld [vmem:[#allocation2 + $0x18] sm:$0xff]
        %v1611 = vld [vmem:[#allocation2 + $0x20] sm:$0xff]
        %v1612 = vld [vmem:[#allocation2 + $0x28] sm:$0xff]
        %v1613 = vld [vmem:[#allocation2 + $0x30] sm:$0xff]
        %v1614 = vld [vmem:[#allocation2 + $0x38] sm:$0xff]
        %vm1615 = vcmp.gt.f32.partialorder %v1607, 0.0
        %vm1616 = vcmp.gt.f32.partialorder %v1608, 0.0
        %vm1617 = vcmp.gt.f32.partialorder %v1609, 0.0
        %vm1618 = vcmp.gt.f32.partialorder %v1610, 0.0
        %vm1619 = vcmp.gt.f32.partialorder %v1611, 0.0
        %vm1620 = vcmp.gt.f32.partialorder %v1612, 0.0
        %vm1621 = vcmp.gt.f32.partialorder %v1613, 0.0
        %vm1622 = vcmp.gt.f32.partialorder %v1614, 0.0
        %v1623 = vmul.f32 %v1607, 0.01
        %v1624 = vmul.f32 %v1608, 0.01
        %v1625 = vmul.f32 %v1609, 0.01
        %v1626 = vmul.f32 %v1610, 0.01
        %v1627 = vmul.f32 %v1611, 0.01
        %v1628 = vmul.f32 %v1612, 0.01
        %v1629 = vmul.f32 %v1613, 0.01
        %v1630 = vmul.f32 %v1614, 0.01
        %v1631 = vsel %vm1615, %v1607, %v1623
        %v1632 = vsel %vm1616, %v1608, %v1624
        %v1633 = vsel %vm1617, %v1609, %v1625
        %v1634 = vsel %vm1618, %v1610, %v1626
        %v1635 = vsel %vm1619, %v1611, %v1627
        %v1636 = vsel %vm1620, %v1612, %v1628
        %v1637 = vsel %vm1621, %v1613, %v1629
        %v1638 = vsel %vm1622, %v1614, %v1630
        %s1639 = sld [smem:[#allocation7]]
        %s1640 = sld [smem:[#allocation7 + $0x1]]
        %s1641 = sld [smem:[#allocation7 + $0x2]]
        %s1642 = sld [smem:[#allocation7 + $0x3]]
        %v1643 = vstv %s1639
        %v1644 = vmul.f32 %v1643, %v501
        %v1645 = vmul.f32 %v1643, %v502
        %v1646 = vmul.f32 %v1643, %v503
        %v1647 = vmul.f32 %v1643, %v504
        %v1648 = vmul.f32 %v1643, %v505
        %v1649 = vmul.f32 %v1643, %v506
        %v1650 = vmul.f32 %v1643, %v507
        %v1651 = vmul.f32 %v1643, %v508
        %v1652 = vstv %s1640
        %v1653 = vmul.f32 %v1652, %v1017
        %v1654 = vmul.f32 %v1652, %v1018
        %v1655 = vmul.f32 %v1652, %v1019
        %v1656 = vmul.f32 %v1652, %v1020
        %v1657 = vmul.f32 %v1652, %v1021
        %v1658 = vmul.f32 %v1652, %v1022
        %v1659 = vmul.f32 %v1652, %v1023
        %v1660 = vmul.f32 %v1652, %v1024
        %v1661 = vadd.f32 %v1644, %v1653
        %v1662 = vadd.f32 %v1645, %v1654
        %v1663 = vadd.f32 %v1646, %v1655
        %v1664 = vadd.f32 %v1647, %v1656
        %v1665 = vadd.f32 %v1648, %v1657
        %v1666 = vadd.f32 %v1649, %v1658
        %v1667 = vadd.f32 %v1650, %v1659
        %v1668 = vadd.f32 %v1651, %v1660
        %v1669 = vstv %s1641
        %v1670 = vmul.f32 %v1669, %v1631
        %v1671 = vmul.f32 %v1669, %v1632
        %v1672 = vmul.f32 %v1669, %v1633
        %v1673 = vmul.f32 %v1669, %v1634
        %v1674 = vmul.f32 %v1669, %v1635
        %v1675 = vmul.f32 %v1669, %v1636
        %v1676 = vmul.f32 %v1669, %v1637
        %v1677 = vmul.f32 %v1669, %v1638
        %v1678 = vadd.f32 %v1661, %v1670
        %v1679 = vadd.f32 %v1662, %v1671
        %v1680 = vadd.f32 %v1663, %v1672
        %v1681 = vadd.f32 %v1664, %v1673
        %v1682 = vadd.f32 %v1665, %v1674
        %v1683 = vadd.f32 %v1666, %v1675
        %v1684 = vadd.f32 %v1667, %v1676
        %v1685 = vadd.f32 %v1668, %v1677
        %1686 = vxpose.xlu0.b32.start [1/16] %v1678, 128
        %1687 = vxpose.xlu0.b32.cont [2/16] %v1679, 128
        %1688 = vxpose.xlu0.b32.cont [3/16] %v1680, 128
        %1689 = vxpose.xlu0.b32.cont [4/16] %v1681, 128
        %1690 = vxpose.xlu0.b32.cont [5/16] %v1682, 128
        %1691 = vxpose.xlu0.b32.cont [6/16] %v1683, 128
        %1692 = vxpose.xlu0.b32.cont [7/16] %v1684, 128
        %1693 = vxpose.xlu0.b32.cont [8/16] %v1685, 128
        %1694 = vxpose.xlu0.b32.cont [9/16] 0.0, 128
        %1695 = vxpose.xlu0.b32.cont [10/16] 0.0, 128
        %1696 = vxpose.xlu0.b32.cont [11/16] 0.0, 128
        %1697 = vxpose.xlu0.b32.cont [12/16] 0.0, 128
        %1698 = vxpose.xlu0.b32.cont [13/16] 0.0, 128
        %1699 = vxpose.xlu0.b32.cont [14/16] 0.0, 128
        %1700 = vxpose.xlu0.b32.cont [15/16] 0.0, 128
        %1701 = vxpose.xlu0.b32.end [16/16] 0.0, 128
        %v1702 = vpop.trf.xlu0
        %v1703 = vpop.trf.xlu0
        %v1704 = vpop.trf.xlu0
        %v1705 = vpop.trf.xlu0
        %v1706 = vpop.trf.xlu0
        %v1707 = vpop.trf.xlu0
        %v1708 = vpop.trf.xlu0
        %v1709 = vpop.trf.xlu0
        %v1710 = vpop.trf.xlu0
        %v1711 = vpop.trf.xlu0
        %v1712 = vpop.trf.xlu0
        %v1713 = vpop.trf.xlu0
        %v1714 = vpop.trf.xlu0
        %v1715 = vpop.trf.xlu0
        %v1716 = vpop.trf.xlu0
        %v1717 = vpop.trf.xlu0
        %vm1718 = vcmask 523264
        %v1720 = vsel %vm1718, %v1702, 0
        %v1723 = vsel %vm1718, %v1703, 0
        %1725 = vmatprep.subr.mxu0 0.0
        %1726 = vmatpush1.msra.mxu0 %v1678
        %1727 = vmatprep.subr.mxu0 0.0
        %1728 = vmatpush1.msra.mxu0 %v1679
        %1729 = vmatprep.subr.mxu0 0.0
        %1730 = vmatpush1.msra.mxu0 %v1680
        %1731 = vmatprep.subr.mxu0 0.0
        %1732 = vmatpush1.msra.mxu0 %v1681
        %1733 = vmatprep.subr.mxu0 0.0
        %1734 = vmatpush1.msra.mxu0 %v1682
        %1735 = vmatprep.subr.mxu0 0.0
        %1736 = vmatpush1.msra.mxu0 %v1683
        %1737 = vmatprep.subr.mxu0 0.0
        %1738 = vmatpush1.msra.mxu0 %v1684
        %1739 = vmatprep.subr.mxu0 0.0
        %1740 = vmatpush1.msra.mxu0 %v1685
        %1741 = vmatprep.subr.mxu0 0.0
        %1742 = vmatpush1.msra.mxu0 0.0
        %1743 = vmatprep.subr.mxu0 0.0
        %1744 = vmatpush1.msra.mxu0 0.0
        %1745 = vmatprep.subr.mxu0 0.0
        %1746 = vmatpush1.msra.mxu0 0.0
        %1747 = vmatprep.subr.mxu0 0.0
        %1748 = vmatpush1.msra.mxu0 0.0
        %1749 = vmatprep.subr.mxu0 0.0
        %1750 = vmatpush1.msra.mxu0 0.0
        %1751 = vmatprep.subr.mxu0 0.0
        %1752 = vmatpush1.msra.mxu0 0.0
        %1753 = vmatprep.subr.mxu0 0.0
        %1754 = vmatpush1.msra.mxu0 0.0
        %1755 = vmatprep.subr.mxu0 0.0
        %1756 = vmatpush1.msra.mxu0 0.0
        %1757 = vmatprep.subr.mxu0 0.0
        %1758 = vmatpush1.msra.mxu0 0.0
        %1759 = vmatprep.subr.mxu0 0.0
        %1760 = vmatpush1.msra.mxu0 0.0
        %1761 = vmatprep.subr.mxu0 0.0
        %1762 = vmatpush1.msra.mxu0 0.0
        %1763 = vmatprep.subr.mxu0 0.0
        %1764 = vmatpush1.msra.mxu0 0.0
        %1765 = vmatprep.subr.mxu0 0.0
        %1766 = vmatpush1.msra.mxu0 0.0
        %1767 = vmatprep.subr.mxu0 0.0
        %1768 = vmatpush1.msra.mxu0 0.0
        %1769 = vmatprep.subr.mxu0 0.0
        %1770 = vmatpush1.msra.mxu0 0.0
        %1771 = vmatprep.subr.mxu0 0.0
        %1772 = vmatpush1.msra.mxu0 0.0
        %1773 = vmatprep.subr.mxu0 0.0
        %1774 = vmatpush1.msra.mxu0 0.0
        %1775 = vmatprep.subr.mxu0 0.0
        %1776 = vmatpush1.msra.mxu0 0.0
        %1777 = vmatprep.subr.mxu0 0.0
        %1778 = vmatpush1.msra.mxu0 0.0
        %1779 = vmatprep.subr.mxu0 0.0
        %1780 = vmatpush1.msra.mxu0 0.0
        %1781 = vmatprep.subr.mxu0 0.0
        %1782 = vmatpush1.msra.mxu0 0.0
        %1783 = vmatprep.subr.mxu0 0.0
        %1784 = vmatpush1.msra.mxu0 0.0
        %1785 = vmatprep.subr.mxu0 0.0
        %1786 = vmatpush1.msra.mxu0 0.0
        %1787 = vmatprep.subr.mxu0 0.0
        %1788 = vmatpush1.msra.mxu0 0.0
        %1789 = vmatprep.mubr.f32.mxu0 0.0
        %1790 = vmatmul.mubr.f32.gmra.mrb[0].mxu0 %v1720
        %v1791 = vpop.f32.mrb[0].mxu0
        %v1792 = vadd.f32 0.0, %v1791
        %v1793 = vpop.f32.mrb[0].mxu0
        %1794 = vmatprep.mubr.f32.mxu0 0.0
        %1795 = vmatmul.mubr.f32.gmra.mrb[0].mxu0 %v1723
        %v1796 = vpop.f32.mrb[0].mxu0
        %v1797 = vadd.f32 0.0, %v1796
        %v1798 = vpop.f32.mrb[0].mxu0
        %1799 = vdwg.mxu0
        %v1800 = vsel %vm355, %v1792, inf
        %1801 = vmin.xlane.f32.xlu0 %v1800
        %v1802 = vpop.xlane.xlu0 %1801
        %v1803 = vsel %vm355, %v1797, inf
        %1804 = vmin.xlane.f32.xlu0 %v1803
        %v1805 = vpop.xlane.xlu0 %1804
        %v1806 = vsub.f32 %v1802, %v1792
        %v1807 = vsub.f32 %v1805, %v1797
        %v1808 = vmul.f32 %v1806, 1.442695
        %v1809 = vpow.pop %v1808
        %v1810 = vmul.f32 %v1807, 1.442695
        %v1811 = vpow.pop %v1810
        %v1812 = vsel %vm355, %v1809, 0.0
        %1813 = vadd.xlane.f32.xlu0 %v1812
        %v1814 = vpop.xlane.xlu0 %1813
        %v1815 = vsel %vm355, %v1811, 0.0
        %1816 = vadd.xlane.f32.xlu0 %v1815
        %v1817 = vpop.xlane.xlu0 %1816
        %v1818 = vrcp.pop %v1814
        %v1819 = vrcp.pop %v1817
        %v1820 = vmul.f32 %v1809, %v1818
        %v1821 = vmul.f32 %v1811, %v1819
        %v1823 = vsel %vm355, %v1678, 0
        %v1826 = vsel %vm355, %v1679, 0
        %v1829 = vsel %vm355, %v1680, 0
        %v1832 = vsel %vm355, %v1681, 0
        %v1835 = vsel %vm355, %v1682, 0
        %v1838 = vsel %vm355, %v1683, 0
        %v1841 = vsel %vm355, %v1684, 0
        %v1844 = vsel %vm355, %v1685, 0
        %v1847 = vsel %vm355, %v1820, 0
        %v1850 = vsel %vm355, %v1821, 0
        %1852 = vmatprep.subr.mxu0 0.0
        %1853 = vmatpush1.xpose.msra.mxu0 %v1847
        %1854 = vmatprep.subr.mxu0 0.0
        %1855 = vmatpush1.xpose.msra.mxu0 %v1850
        %1856 = vmatprep.subr.mxu0 0.0
        %1857 = vmatpush1.xpose.msra.mxu0 0.0
        %1858 = vmatprep.subr.mxu0 0.0
        %1859 = vmatpush1.xpose.msra.mxu0 0.0
        %1860 = vmatprep.subr.mxu0 0.0
        %1861 = vmatpush1.xpose.msra.mxu0 0.0
        %1862 = vmatprep.subr.mxu0 0.0
        %1863 = vmatpush1.xpose.msra.mxu0 0.0
        %1864 = vmatprep.subr.mxu0 0.0
        %1865 = vmatpush1.xpose.msra.mxu0 0.0
        %1866 = vmatprep.subr.mxu0 0.0
        %1867 = vmatpush1.xpose.msra.mxu0 0.0
        %1868 = vmatprep.subr.mxu0 0.0
        %1869 = vmatpush1.xpose.msra.mxu0 0.0
        %1870 = vmatprep.subr.mxu0 0.0
        %1871 = vmatpush1.xpose.msra.mxu0 0.0
        %1872 = vmatprep.subr.mxu0 0.0
        %1873 = vmatpush1.xpose.msra.mxu0 0.0
        %1874 = vmatprep.subr.mxu0 0.0
        %1875 = vmatpush1.xpose.msra.mxu0 0.0
        %1876 = vmatprep.subr.mxu0 0.0
        %1877 = vmatpush1.xpose.msra.mxu0 0.0
        %1878 = vmatprep.subr.mxu0 0.0
        %1879 = vmatpush1.xpose.msra.mxu0 0.0
        %1880 = vmatprep.subr.mxu0 0.0
        %1881 = vmatpush1.xpose.msra.mxu0 0.0
        %1882 = vmatprep.subr.mxu0 0.0
        %1883 = vmatpush1.xpose.msra.mxu0 0.0
        %1884 = vmatprep.subr.mxu0 0.0
        %1885 = vmatpush1.xpose.msra.mxu0 0.0
        %1886 = vmatprep.subr.mxu0 0.0
        %1887 = vmatpush1.xpose.msra.mxu0 0.0
        %1888 = vmatprep.subr.mxu0 0.0
        %1889 = vmatpush1.xpose.msra.mxu0 0.0
        %1890 = vmatprep.subr.mxu0 0.0
        %1891 = vmatpush1.xpose.msra.mxu0 0.0
        %1892 = vmatprep.subr.mxu0 0.0
        %1893 = vmatpush1.xpose.msra.mxu0 0.0
        %1894 = vmatprep.subr.mxu0 0.0
        %1895 = vmatpush1.xpose.msra.mxu0 0.0
        %1896 = vmatprep.subr.mxu0 0.0
        %1897 = vmatpush1.xpose.msra.mxu0 0.0
        %1898 = vmatprep.subr.mxu0 0.0
        %1899 = vmatpush1.xpose.msra.mxu0 0.0
        %1900 = vmatprep.subr.mxu0 0.0
        %1901 = vmatpush1.xpose.msra.mxu0 0.0
        %1902 = vmatprep.subr.mxu0 0.0
        %1903 = vmatpush1.xpose.msra.mxu0 0.0
        %1904 = vmatprep.subr.mxu0 0.0
        %1905 = vmatpush1.xpose.msra.mxu0 0.0
        %1906 = vmatprep.subr.mxu0 0.0
        %1907 = vmatpush1.xpose.msra.mxu0 0.0
        %1908 = vmatprep.subr.mxu0 0.0
        %1909 = vmatpush1.xpose.msra.mxu0 0.0
        %1910 = vmatprep.subr.mxu0 0.0
        %1911 = vmatpush1.xpose.msra.mxu0 0.0
        %1912 = vmatprep.subr.mxu0 0.0
        %1913 = vmatpush1.xpose.msra.mxu0 0.0
        %1914 = vmatprep.subr.mxu0 0.0
        %1915 = vmatpush1.xpose.msra.mxu0 0.0
        %1916 = vmatprep.mubr.f32.mxu0 0.0
        %1917 = vmatmul.mubr.f32.gmra.mrb[0].mxu0 %v1823
        %v1918 = vpop.f32.mrb[0].mxu0
        %v1919 = vadd.f32 0.0, %v1918
        %v1920 = vpop.f32.mrb[0].mxu0
        %1921 = vmatprep.mubr.f32.mxu0 0.0
        %1922 = vmatmul.mubr.f32.gmra.mrb[0].mxu0 %v1826
        %v1923 = vpop.f32.mrb[0].mxu0
        %v1924 = vadd.f32 0.0, %v1923
        %v1925 = vpop.f32.mrb[0].mxu0
        %1926 = vmatprep.mubr.f32.mxu0 0.0
        %1927 = vmatmul.mubr.f32.gmra.mrb[0].mxu0 %v1829
        %v1928 = vpop.f32.mrb[0].mxu0
        %v1929 = vadd.f32 0.0, %v1928
        %v1930 = vpop.f32.mrb[0].mxu0
        %1931 = vmatprep.mubr.f32.mxu0 0.0
        %1932 = vmatmul.mubr.f32.gmra.mrb[0].mxu0 %v1832
        %v1933 = vpop.f32.mrb[0].mxu0
        %v1934 = vadd.f32 0.0, %v1933
        %v1935 = vpop.f32.mrb[0].mxu0
        %1936 = vmatprep.mubr.f32.mxu0 0.0
        %1937 = vmatmul.mubr.f32.gmra.mrb[0].mxu0 %v1835
        %v1938 = vpop.f32.mrb[0].mxu0
        %v1939 = vadd.f32 0.0, %v1938
        %v1940 = vpop.f32.mrb[0].mxu0
        %1941 = vmatprep.mubr.f32.mxu0 0.0
        %1942 = vmatmul.mubr.f32.gmra.mrb[0].mxu0 %v1838
        %v1943 = vpop.f32.mrb[0].mxu0
        %v1944 = vadd.f32 0.0, %v1943
        %v1945 = vpop.f32.mrb[0].mxu0
        %1946 = vmatprep.mubr.f32.mxu0 0.0
        %1947 = vmatmul.mubr.f32.gmra.mrb[0].mxu0 %v1841
        %v1948 = vpop.f32.mrb[0].mxu0
        %v1949 = vadd.f32 0.0, %v1948
        %v1950 = vpop.f32.mrb[0].mxu0
        %1951 = vmatprep.mubr.f32.mxu0 0.0
        %1952 = vmatmul.mubr.f32.gmra.mrb[0].mxu0 %v1844
        %v1953 = vpop.f32.mrb[0].mxu0
        %v1954 = vadd.f32 0.0, %v1953
        %v1955 = vpop.f32.mrb[0].mxu0
        %1956 = vdwg.mxu0
        %v1957 = vstv %s1642
        %v1958 = vmul.f32 %v1957, %v1919
        %v1959 = vmul.f32 %v1957, %v1924
        %v1960 = vmul.f32 %v1957, %v1929
        %v1961 = vmul.f32 %v1957, %v1934
        %v1962 = vmul.f32 %v1957, %v1939
        %v1963 = vmul.f32 %v1957, %v1944
        %v1964 = vmul.f32 %v1957, %v1949
        %v1965 = vmul.f32 %v1957, %v1954
        %v1966 = vadd.f32 %v1958, %v1678
        %v1967 = vadd.f32 %v1959, %v1679
        %v1968 = vadd.f32 %v1960, %v1680
        %v1969 = vadd.f32 %v1961, %v1681
        %v1970 = vadd.f32 %v1962, %v1682
        %v1971 = vadd.f32 %v1963, %v1683
        %v1972 = vadd.f32 %v1964, %v1684
        %v1973 = vadd.f32 %v1965, %v1685
        %1974 = vst.msk [vmem:[%s337] sm:$0xff] %vm355, %v1966
        %1975 = vst.msk [vmem:[%s337 + $0x8] sm:$0xff] %vm355, %v1967
        %1976 = vst.msk [vmem:[%s337 + $0x10] sm:$0xff] %vm355, %v1968
        %1977 = vst.msk [vmem:[%s337 + $0x18] sm:$0xff] %vm355, %v1969
        %1978 = vst.msk [vmem:[%s337 + $0x20] sm:$0xff] %vm355, %v1970
        %1979 = vst.msk [vmem:[%s337 + $0x28] sm:$0xff] %vm355, %v1971
        %1980 = vst.msk [vmem:[%s337 + $0x30] sm:$0xff] %vm355, %v1972
        %1981 = vst.msk [vmem:[%s337 + $0x38] sm:$0xff] %vm355, %v1973
        %s1982 = sand.u32 %s207, 1
        %s1983 = scalar_lea.sflag [#allocation5], %s1982
        %s1984 = sand.u32 %s207, 1
        %s1985 = smul.addr %s1984, 64
        %s1986 = scalar_lea.vmem [#allocation8], %s1985
        // Predicated region
        $region61: #{tpu_custom_call.1} parent=51 // pred_check
          %p1987 = pneg %p217
        $region62: #{tpu_custom_call.1} parent=51 // pred_check_branch
          %1989 = sbr.rel (%p1987) target = $region64
        $region63: #{tpu_custom_call.1} parent=51 // pred_region
          %s1991 = ssub.s32 1024, 1024
          %1992 = vsyncadd %s1983, %s1991
          %s1993 = smul.addr %s26, 8
          %s1994 = smul.addr %s1993, 128
          %s1995 = scalar_lea.hbm %s8, %s1994
          %s1996 = sshll.u32 %s1986, 4
          %s1997 = int_to_ptr.vmem [resolvable:$true] %s1996
          %2002 = dma.vmem_to_hbm [thread:$0]  %s1997, 1024, %s1995, %s1983, 128, 128, 8
        $region64: #{tpu_custom_call.1} parent=51 // pred_fallthru
          _
      $region52: #{tpu_custom_call.1} parent=5 // pred_fallthru
        _
      %p2003 = scmp.le.s32.totalorder 2, %s21
      // Predicated region
      $region65: #{tpu_custom_call.1} parent=5 // pred_check
        %p2004 = pneg %p2003
      $region66: #{tpu_custom_call.1} parent=5 // pred_check_branch
        %2006 = sbr.rel (%p2004) target = $region68
      $region67: #{tpu_custom_call.1} parent=5 // pred_region
        %s2007 = ssub.s32 %s21, 2
        // Predicated region
        $region69: #{tpu_custom_call.1} parent=67 // pred_check
          %p2008 = pneg %p223
        $region70: #{tpu_custom_call.1} parent=67 // pred_check_branch
          %2010 = sbr.rel (%p2008) target = $region72
        $region71: #{tpu_custom_call.1} parent=67 // pred_region
          %s2011 = sand.u32 %s208, 1
          %s2012 = scalar_lea.sflag [#allocation5], %s2011
          %s2013 = sand.u32 %s208, 1
          %s2014 = smul.addr %s2013, 64
          %s2015 = scalar_lea.vmem [#allocation8], %s2014
          %2016 = dma.done %s2012, 1024
        $region72: #{tpu_custom_call.1} parent=67 // pred_fallthru
          _
      $region68: #{tpu_custom_call.1} parent=5 // pred_fallthru
        _
    $region6: #{tpu_custom_call.1} parent=1 // loop_footer
      %s25 = sadd.s32 1, %s21
    $region7: #{tpu_custom_call.1} parent=1 // loop_footer_branch
      %20 = sbr.rel target = $region3
    $region8: #{tpu_custom_call.1} parent=1 // loop_exit
      _
    %2017 = vsyncpa [#allocation4], 1
    %s2018 = scalar_lea.sflag [#allocation4], 1
    %2019 = vsyncpa %s2018, 1
    %2020 = vsyncpa [#allocation5], 1
    %s2021 = scalar_lea.sflag [#allocation5], 1
    %2022 = vsyncpa %s2021, 1
    %2023 = vsyncpa [#allocation6], 1
    %s2024 = scalar_lea.sflag [#allocation6], 1
    %2025 = vsyncpa %s2024, 1

</llo_original>
